<compile_context>
chip_gen: v7x
topology: tpu7x:2x2x1
jax: 0.10.0
libtpu: 0.0.40
codegen_flags: <defaults>
</compile_context>

<pallas_src>
import functools

import jax
import jax.numpy as jnp
from jax import lax
from jax.experimental import pallas as pl
from jax.experimental.pallas import tpu as pltpu


def _ae_linear_kernel(x_ref, we_ref, be_ref, wd_ref, bd_ref, o_ref, *, compute_dtype):
    # x_ref:  (TM, input_dim)            activation tile (original dtype, e.g. f32)
    # we_ref: (output_dim, input_dim)    encoder weight, torch layout, bf16 (resident)
    # be_ref: (1, output_dim)            encoder bias, f32 (resident)
    # wd_ref: (input_dim, output_dim)    decoder weight, torch layout, bf16 (resident)
    # bd_ref: (1, input_dim)             decoder bias, f32 (resident)
    x = x_ref[...].astype(compute_dtype)

    # encoded = x @ W_e^T + b_e  -- contract trailing axes (no transpose materialized).
    enc = lax.dot_general(
        x, we_ref[...],
        dimension_numbers=(((1,), (1,)), ((), ())),
        preferred_element_type=jnp.float32,
    )
    enc = enc + be_ref[...]                 # bias add in f32 (VPU f32 path on all chips)
    enc = enc.astype(compute_dtype)         # narrow only the MXU operand

    # decoded = encoded @ W_d^T + b_d
    dec = lax.dot_general(
        enc, wd_ref[...],
        dimension_numbers=(((1,), (1,)), ((), ())),
        preferred_element_type=jnp.float32,
    )
    dec = dec + bd_ref[...]
    o_ref[...] = dec.astype(o_ref.dtype)


def _round_up(x, m):
    return (x + m - 1) // m * m


@functools.partial(jax.jit, static_argnames=("block_m", "use_bf16"))
def ae_linear_forward(x, w_enc, b_enc, w_dec, b_dec, *, block_m=512, use_bf16=True):
    """x: (B, input_dim); w_enc: (output_dim, input_dim); w_dec: (input_dim, output_dim).

    Matches torch.nn.Linear semantics: y = x @ W.T + b (encoder then decoder).
    """
    B, input_dim = x.shape
    output_dim = w_enc.shape[0]
    compute_dtype = jnp.bfloat16 if use_bf16 else x.dtype

    # Torch-layout weights are used as-is (no transpose). The bf16 cast halves weight
    # DMA bytes; in production, store the weights in bf16 so this is a no-op.
    we = w_enc.astype(compute_dtype)                       # (output_dim, input_dim)
    wd = w_dec.astype(compute_dtype)                       # (input_dim, output_dim)
    be = b_enc.reshape(1, output_dim).astype(jnp.float32)
    bd = b_dec.reshape(1, input_dim).astype(jnp.float32)

    # Batch tile: multiple of 8 sublanes; cap at (rounded-up) B for small batches.
    tm = min(block_m, _round_up(B, 8))
    b_padded = _round_up(B, tm)
    if b_padded != B:
        x = jnp.pad(x, ((0, b_padded - B), (0, 0)))

    grid = (b_padded // tm,)
    kernel = functools.partial(_ae_linear_kernel, compute_dtype=compute_dtype)

    out = pl.pallas_call(
        kernel,
        out_shape=jax.ShapeDtypeStruct((b_padded, input_dim), x.dtype),
        grid=grid,
        in_specs=[
            pl.BlockSpec((tm, input_dim), lambda i: (i, 0)),         # x: streamed/pipelined
            pl.BlockSpec((output_dim, input_dim), lambda i: (0, 0)), # W_e: VMEM-resident
            pl.BlockSpec((1, output_dim), lambda i: (0, 0)),         # b_e: VMEM-resident
            pl.BlockSpec((input_dim, output_dim), lambda i: (0, 0)), # W_d: VMEM-resident
            pl.BlockSpec((1, input_dim), lambda i: (0, 0)),          # b_d: VMEM-resident
        ],
        out_specs=pl.BlockSpec((tm, input_dim), lambda i: (i, 0)),
        compiler_params=pltpu.CompilerParams(
            dimension_semantics=("parallel",),   # megacore split across v7x's 2 TCs
        ),
    )(x, we, be, wd, bd)

    if b_padded != B:
        out = out[:B]
    return out


def init_linear_params(key, in_features, out_features):
    """Deterministic init mimicking torch.nn.Linear default (uniform +-1/sqrt(fan_in))."""
    k_w, k_b = jax.random.split(key)
    bound = 1.0 / jnp.sqrt(jnp.float32(in_features))
    w = jax.random.uniform(k_w, (out_features, in_features), jnp.float32, -bound, bound)
    b = jax.random.uniform(k_b, (out_features,), jnp.float32, -bound, bound)
    return w, b


if __name__ == "__main__":
    key = jax.random.PRNGKey(0)
    k_x, k_enc, k_dec = jax.random.split(key, 3)

    # Small but lane-aligned shapes (features are multiples of 128 so vregs/MXU/stores
    # are not padding-dominated); batch of 1024 -> grid of two 512-row tiles.
    batch = 1024
    input_dim = 256
    output_dim = 128

    x = jax.random.normal(k_x, (batch, input_dim), jnp.float32)
    w_enc, b_enc = init_linear_params(k_enc, input_dim, output_dim)
    w_dec, b_dec = init_linear_params(k_dec, output_dim, input_dim)

    # --- f32 path: exact comparison against the plain-JAX reference ---
    out_f32 = jax.block_until_ready(
        ae_linear_forward(x, w_enc, b_enc, w_dec, b_dec, block_m=512, use_bf16=False)
    )
    ref_f32 = (x @ w_enc.T + b_enc) @ w_dec.T + b_dec
    assert out_f32.shape == (batch, input_dim)
    assert jnp.allclose(out_f32, ref_f32, atol=1e-3, rtol=1e-3)

    # --- bf16-MXU path: compare against a bf16-operand / f32-accumulation reference ---
    out_bf16 = jax.block_until_ready(
        ae_linear_forward(x, w_enc, b_enc, w_dec, b_dec, block_m=512, use_bf16=True)
    )
    xb = x.astype(jnp.bfloat16)
    enc_ref = jnp.dot(xb, w_enc.astype(jnp.bfloat16).T,
                      preferred_element_type=jnp.float32) + b_enc
    ref_bf16 = jnp.dot(enc_ref.astype(jnp.bfloat16), w_dec.astype(jnp.bfloat16).T,
                       preferred_element_type=jnp.float32) + b_dec
    assert out_bf16.shape == (batch, input_dim)
    assert jnp.allclose(out_bf16, ref_bf16, atol=2e-3, rtol=2e-3)

    print("KERNEL_OK")
</pallas_src>

<mosaic_0001>
module attributes {stable_mosaic.version = 11 : i64} {
  func.func @_ae_linear_kernel(%arg0: i32, %arg1: memref<512x256xf32, #tpu.memory_space<vmem>>, %arg2: memref<128x256xf32, #tpu.memory_space<vmem>>, %arg3: memref<1x128xf32, #tpu.memory_space<vmem>>, %arg4: memref<256x128xf32, #tpu.memory_space<vmem>>, %arg5: memref<1x256xf32, #tpu.memory_space<vmem>>, %arg6: memref<512x256xf32, #tpu.memory_space<vmem>>) attributes {dimension_semantics = [#tpu.dimension_semantics<parallel>], iteration_bounds = array<i64: 2>, scalar_prefetch = 0 : i64, scratch_operands = 0 : i64, tpu.core_type = #tpu.core_type<tc>, window_params = [{transform_indices = @transform_0, window_bounds = array<i64: 512, 256>}, {pipeline_mode = #tpu.pipeline_mode<synchronous>, transform_indices = @transform_1, window_bounds = array<i64: 128, 256>}, {pipeline_mode = #tpu.pipeline_mode<synchronous>, transform_indices = @transform_2, window_bounds = array<i64: 1, 128>}, {pipeline_mode = #tpu.pipeline_mode<synchronous>, transform_indices = @transform_3, window_bounds = array<i64: 256, 128>}, {pipeline_mode = #tpu.pipeline_mode<synchronous>, transform_indices = @transform_4, window_bounds = array<i64: 1, 256>}, {transform_indices = @transform_5, window_bounds = array<i64: 512, 256>}]} {
    %c0 = arith.constant 0 : index
    %c0_0 = arith.constant 0 : index
    %0 = vector.load %arg1[%c0, %c0_0] : memref<512x256xf32, #tpu.memory_space<vmem>>, vector<512x256xf32>
    %c0_1 = arith.constant 0 : index
    %c0_2 = arith.constant 0 : index
    %1 = vector.load %arg2[%c0_1, %c0_2] : memref<128x256xf32, #tpu.memory_space<vmem>>, vector<128x256xf32>
    %cst = arith.constant dense<0.000000e+00> : vector<512x128xf32>
    %2 = tpu.matmul %0, %1, %cst {dimension_numbers = #tpu.dot_dimension_numbers<[1], [1], [0], [0], [0, 0, 1, 0], [], []>} : vector<512x256xf32>, vector<128x256xf32>, vector<512x128xf32> -> vector<512x128xf32>
    %c0_3 = arith.constant 0 : index
    %c0_4 = arith.constant 0 : index
    %3 = vector.load %arg3[%c0_3, %c0_4] : memref<1x128xf32, #tpu.memory_space<vmem>>, vector<1x128xf32>
    %4 = vector.broadcast %3 : vector<1x128xf32> to vector<512x128xf32>
    %5 = arith.addf %2, %4 : vector<512x128xf32>
    %c0_5 = arith.constant 0 : index
    %c0_6 = arith.constant 0 : index
    %6 = vector.load %arg4[%c0_5, %c0_6] : memref<256x128xf32, #tpu.memory_space<vmem>>, vector<256x128xf32>
    %cst_7 = arith.constant dense<0.000000e+00> : vector<512x256xf32>
    %7 = tpu.matmul %5, %6, %cst_7 {dimension_numbers = #tpu.dot_dimension_numbers<[1], [1], [0], [0], [0, 0, 1, 0], [], []>} : vector<512x128xf32>, vector<256x128xf32>, vector<512x256xf32> -> vector<512x256xf32>
    %c0_8 = arith.constant 0 : index
    %c0_9 = arith.constant 0 : index
    %8 = vector.load %arg5[%c0_8, %c0_9] : memref<1x256xf32, #tpu.memory_space<vmem>>, vector<1x256xf32>
    %9 = vector.broadcast %8 : vector<1x256xf32> to vector<512x256xf32>
    %10 = arith.addf %7, %9 : vector<512x256xf32>
    %c0_10 = arith.constant 0 : index
    %c0_11 = arith.constant 0 : index
    %11 = vector.load %arg6[%c0_10, %c0_11] : memref<512x256xf32, #tpu.memory_space<vmem>>, vector<512x256xf32>
    tpu.vector_store %arg6[%c0_10, %c0_11], %10 {strides = array<i32>} : memref<512x256xf32, #tpu.memory_space<vmem>>, vector<512x256xf32>,
    return
  }
  func.func @transform_0(%arg0: i32) -> (i32, i32) {
    %c0_i32 = arith.constant 0 : i32
    %c0_i32_0 = arith.constant 0 : i32
    return %arg0, %c0_i32 : i32, i32
  }
  func.func @transform_1(%arg0: i32) -> (i32, i32) {
    %c0_i32 = arith.constant 0 : i32
    %c0_i32_0 = arith.constant 0 : i32
    %c0_i32_1 = arith.constant 0 : i32
    return %c0_i32, %c0_i32_0 : i32, i32
  }
  func.func @transform_2(%arg0: i32) -> (i32, i32) {
    %c0_i32 = arith.constant 0 : i32
    %c0_i32_0 = arith.constant 0 : i32
    %c0_i32_1 = arith.constant 0 : i32
    return %c0_i32, %c0_i32_0 : i32, i32
  }
  func.func @transform_3(%arg0: i32) -> (i32, i32) {
    %c0_i32 = arith.constant 0 : i32
    %c0_i32_0 = arith.constant 0 : i32
    %c0_i32_1 = arith.constant 0 : i32
    return %c0_i32, %c0_i32_0 : i32, i32
  }
  func.func @transform_4(%arg0: i32) -> (i32, i32) {
    %c0_i32 = arith.constant 0 : i32
    %c0_i32_0 = arith.constant 0 : i32
    %c0_i32_1 = arith.constant 0 : i32
    return %c0_i32, %c0_i32_0 : i32, i32
  }
  func.func @transform_5(%arg0: i32) -> (i32, i32) {
    %c0_i32 = arith.constant 0 : i32
    %c0_i32_0 = arith.constant 0 : i32
    return %arg0, %c0_i32 : i32, i32
  }
}

</mosaic_0001>

<llo_original>
// kernel: ae_linear_forward.1
$region0: #{ae_linear_forward.1}
  #allocation0 [shape = 'u32[]', space=smem, size = 0x4, offset = 0x4, fixed_abs, tag = 'smem constant byte address 0x4 - core index']
  #allocation1 [shape = 'u32[144,128]{1,0:T(1,128)}', space=vmem, size = 0x12000, scoped, tag = 'internal scratch']
  %s0 = inlined_call_operand.hbm [shape: f32[1024,256], index: 0, kind: input, shape index: {}]
  %s1 = inlined_call_operand.hbm [shape: f32[128,256], index: 1, kind: input, shape index: {}]
  %s2 = inlined_call_operand.vmem [shape: f32[1,128], index: 2, kind: input, shape index: {}]
  %s3 = inlined_call_operand.hbm [shape: f32[256,128], index: 3, kind: input, shape index: {}]
  %s4 = inlined_call_operand.vmem [shape: f32[1,256], index: 4, kind: input, shape index: {}]
  %s5 = inlined_call_operand.hbm [shape: f32[1024,256], index: 5, kind: output, shape index: {}]
  %s6 = sld [smem:[#allocation0]]
  $region65: #{ae_linear_forward.1} parent=0
    _
  %s8 = ssub.s32 1, %s6
  %s9 = scalar_select 0, %s8, %s6
  $region1: #{ae_linear_forward.1} parent=0
    #allocation2 [shape = 'u8[1048576]{0}', space=vmem, size = 0x100000, scoped, tag = 'input window, operand 0']
    #allocation3 [shape = 's32[2]{0}', space=sflag, size = 0x8, scoped, tag = 'scoped memory for ae_linear_forward.1']
    #allocation4 [shape = 's32[2]{0}', space=sflag, size = 0x8, scoped, tag = 'scoped memory for ae_linear_forward.1']
    #allocation5 [shape = 'u8[131072]{0}', space=vmem, size = 0x20000, scoped, tag = 'input window, operand 1, single buffered']
    #allocation6 [shape = 's32[1]{0}', space=sflag, size = 0x4, scoped, tag = 'scoped memory for ae_linear_forward.1']
    #allocation7 [shape = 'u8[131072]{0}', space=vmem, size = 0x20000, scoped, tag = 'input window, operand 3, single buffered']
    #allocation8 [shape = 'u8[1048576]{0}', space=vmem, size = 0x100000, scoped, tag = 'output window, operand 0']
    %10 = vsyncpa [#allocation3], 0
    %s11 = scalar_lea.sflag [#allocation3], 1
    %12 = vsyncpa %s11, 0
    %13 = vsyncpa [#allocation6], 0
    %14 = vsyncpa [#allocation4], 0
    %s15 = scalar_lea.sflag [#allocation4], 1
    %16 = vsyncpa %s15, 0
    loop: start=0, step=1, limit=4
    $region2: #{ae_linear_forward.1} parent=1 // loop_pre_header
      _
    $region3: #{ae_linear_forward.1} parent=1 // loop_header
      %s18 = sphi 0, %s22
      %p19 = scmp.ge.s32.totalorder %s18, 4
      %s28 = sphi 0, %s30
      %s31 = sphi 0, %s28
      %s32 = sphi 0, %s31
      %s48 = sphi 0, %s32
      %s52 = sphi 0, %s52
      %s54 = sphi 0, %s52
      %s55 = sphi 0, %s54
      %s69 = sphi 0, %s55
      %s73 = sphi 0, %s73
      %s75 = sphi 0, %s73
      %s76 = sphi 0, %s75
      %s90 = sphi 0, %s76
      %s94 = sphi 0, %s94
      %s96 = sphi 0, %s94
      %s97 = sphi 0, %s96
      %s111 = sphi 0, %s97
      %s115 = sphi 0, %s115
      %s117 = sphi 0, %s115
      %s118 = sphi 0, %s117
      %s132 = sphi 0, %s118
      %s138 = sphi 0, %s140
      %s141 = sphi 0, %s138
      %s142 = sphi 0, %s141
      %s158 = sphi 0, %s142
    $region4: #{ae_linear_forward.1} parent=1 // loop_header_branch
      %21 = sbr.rel (%p19) target = $region8
    $region5: #{ae_linear_forward.1} parent=1 // loop_body
      %s23 = ssub.s32 %s18, 1
      %s24 = ssub.s32 %s18, 2
      %s25 = sadd.s32 %s18, 1
      %s26 = ssub.s32 %s18, %s25
      %p27 = scmp.eq.s32.totalorder %s26, 0
      %s29 = sadd.s32 %s28, 1
      %s30 = scalar_select %p27, %s28, %s29
      %p33 = pneg %p27
      %p34 = scmp.eq.s32.totalorder %s18, 1
      %p35 = por %p33, %p34
      %p36 = scmp.ne.s32.totalorder %s28, %s31
      %p37 = scmp.eq.s32.totalorder %s18, 0
      %p38 = por %p36, %p37
      %p39 = scmp.ne.s32.totalorder %s28, %s31
      %p40 = scmp.eq.s32.totalorder %s23, 1
      %p41 = por %p39, %p40
      %p42 = scmp.ne.s32.totalorder %s31, %s32
      %p43 = scmp.eq.s32.totalorder %s23, 0
      %p44 = por %p42, %p43
      %p45 = scmp.ne.s32.totalorder %s31, %s32
      %p46 = scmp.eq.s32.totalorder %s24, 1
      %p47 = por %p45, %p46
      %p49 = scmp.ne.s32.totalorder %s32, %s48
      %p50 = scmp.eq.s32.totalorder %s24, 0
      %p51 = por %p49, %p50
      %s53 = sadd.s32 %s52, 1
      %p56 = scmp.eq.s32.totalorder %s18, 1
      %p57 = scmp.ne.s32.totalorder %s52, %s54
      %p58 = scmp.eq.s32.totalorder %s18, 0
      %p59 = por %p57, %p58
      %p60 = scmp.ne.s32.totalorder %s52, %s54
      %p61 = scmp.eq.s32.totalorder %s23, 1
      %p62 = por %p60, %p61
      %p63 = scmp.ne.s32.totalorder %s54, %s55
      %p64 = scmp.eq.s32.totalorder %s23, 0
      %p65 = por %p63, %p64
      %p66 = scmp.ne.s32.totalorder %s54, %s55
      %p67 = scmp.eq.s32.totalorder %s24, 1
      %p68 = por %p66, %p67
      %p70 = scmp.ne.s32.totalorder %s55, %s69
      %p71 = scmp.eq.s32.totalorder %s24, 0
      %p72 = por %p70, %p71
      %s74 = sadd.s32 %s73, 1
      %p77 = scmp.eq.s32.totalorder %s18, 1
      %p78 = scmp.ne.s32.totalorder %s73, %s75
      %p79 = scmp.eq.s32.totalorder %s18, 0
      %p80 = por %p78, %p79
      %p81 = scmp.ne.s32.totalorder %s73, %s75
      %p82 = scmp.eq.s32.totalorder %s23, 1
      %p83 = por %p81, %p82
      %p84 = scmp.ne.s32.totalorder %s75, %s76
      %p85 = scmp.eq.s32.totalorder %s23, 0
      %p86 = por %p84, %p85
      %p87 = scmp.ne.s32.totalorder %s75, %s76
      %p88 = scmp.eq.s32.totalorder %s24, 1
      %p89 = por %p87, %p88
      %p91 = scmp.ne.s32.totalorder %s76, %s90
      %p92 = scmp.eq.s32.totalorder %s24, 0
      %p93 = por %p91, %p92
      %s95 = sadd.s32 %s94, 1
      %p98 = scmp.eq.s32.totalorder %s18, 1
      %p99 = scmp.ne.s32.totalorder %s94, %s96
      %p100 = scmp.eq.s32.totalorder %s18, 0
      %p101 = por %p99, %p100
      %p102 = scmp.ne.s32.totalorder %s94, %s96
      %p103 = scmp.eq.s32.totalorder %s23, 1
      %p104 = por %p102, %p103
      %p105 = scmp.ne.s32.totalorder %s96, %s97
      %p106 = scmp.eq.s32.totalorder %s23, 0
      %p107 = por %p105, %p106
      %p108 = scmp.ne.s32.totalorder %s96, %s97
      %p109 = scmp.eq.s32.totalorder %s24, 1
      %p110 = por %p108, %p109
      %p112 = scmp.ne.s32.totalorder %s97, %s111
      %p113 = scmp.eq.s32.totalorder %s24, 0
      %p114 = por %p112, %p113
      %s116 = sadd.s32 %s115, 1
      %p119 = scmp.eq.s32.totalorder %s18, 1
      %p120 = scmp.ne.s32.totalorder %s115, %s117
      %p121 = scmp.eq.s32.totalorder %s18, 0
      %p122 = por %p120, %p121
      %p123 = scmp.ne.s32.totalorder %s115, %s117
      %p124 = scmp.eq.s32.totalorder %s23, 1
      %p125 = por %p123, %p124
      %p126 = scmp.ne.s32.totalorder %s117, %s118
      %p127 = scmp.eq.s32.totalorder %s23, 0
      %p128 = por %p126, %p127
      %p129 = scmp.ne.s32.totalorder %s117, %s118
      %p130 = scmp.eq.s32.totalorder %s24, 1
      %p131 = por %p129, %p130
      %p133 = scmp.ne.s32.totalorder %s118, %s132
      %p134 = scmp.eq.s32.totalorder %s24, 0
      %p135 = por %p133, %p134
      %s136 = ssub.s32 %s18, %s25
      %p137 = scmp.eq.s32.totalorder %s136, 0
      %s139 = sadd.s32 %s138, 1
      %s140 = scalar_select %p137, %s138, %s139
      %p143 = pneg %p137
      %p144 = scmp.eq.s32.totalorder %s18, 1
      %p145 = por %p143, %p144
      %p146 = scmp.ne.s32.totalorder %s138, %s141
      %p147 = scmp.eq.s32.totalorder %s18, 0
      %p148 = por %p146, %p147
      %p149 = scmp.ne.s32.totalorder %s138, %s141
      %p150 = scmp.eq.s32.totalorder %s23, 1
      %p151 = por %p149, %p150
      %p152 = scmp.ne.s32.totalorder %s141, %s142
      %p153 = scmp.eq.s32.totalorder %s23, 0
      %p154 = por %p152, %p153
      %p155 = scmp.ne.s32.totalorder %s141, %s142
      %p156 = scmp.eq.s32.totalorder %s24, 1
      %p157 = por %p155, %p156
      %p159 = scmp.ne.s32.totalorder %s142, %s158
      %p160 = scmp.eq.s32.totalorder %s24, 0
      %p161 = por %p159, %p160
      %p162 = scmp.le.s32.totalorder 1, %s18
      %p163 = scmp.lt.s32.totalorder %s18, 3
      %p164 = pnand %p162, %p163
      %p165 = pneg %p164
      // Predicated region
      $region9: #{ae_linear_forward.1} parent=5 // pred_check
        _
      $region10: #{ae_linear_forward.1} parent=5 // pred_check_branch
        %167 = sbr.rel (%p164) target = $region12
      $region11: #{ae_linear_forward.1} parent=5 // pred_region
        %s168 = ssub.s32 %s18, 1
        // Predicated region
        $region13: #{ae_linear_forward.1} parent=11 // pred_check
          %p169 = pneg %p65
        $region14: #{ae_linear_forward.1} parent=11 // pred_check_branch
          %171 = sbr.rel (%p169) target = $region16
        $region15: #{ae_linear_forward.1} parent=11 // pred_region
          %s173 = ssub.s32 4096, 4096
          %174 = vsyncadd [#allocation6], %s173
          %s175 = sshll.u32 [#allocation5], 4
          %s176 = int_to_ptr.vmem [resolvable:$true] %s175
          %181 = dma.hbm_to_vmem [thread:$0]  %s1, 4096, %s176, [#allocation6], 256, 256, 16
        $region16: #{ae_linear_forward.1} parent=11 // pred_fallthru
          _
        // Predicated region
        $region17: #{ae_linear_forward.1} parent=11 // pred_check
          %p182 = pneg %p86
        $region18: #{ae_linear_forward.1} parent=11 // pred_check_branch
          %184 = sbr.rel (%p182) target = $region20
        $region19: #{ae_linear_forward.1} parent=11 // pred_region
          _
        $region20: #{ae_linear_forward.1} parent=11 // pred_fallthru
          _
        // Predicated region
        $region21: #{ae_linear_forward.1} parent=11 // pred_check
          %p185 = pneg %p107
        $region22: #{ae_linear_forward.1} parent=11 // pred_check_branch
          %187 = sbr.rel (%p185) target = $region24
        $region23: #{ae_linear_forward.1} parent=11 // pred_region
          %s189 = ssub.s32 4096, 4096
          %190 = vsyncadd [#allocation6], %s189
          %s191 = sshll.u32 [#allocation7], 4
          %s192 = int_to_ptr.vmem [resolvable:$true] %s191
          %197 = dma.hbm_to_vmem [thread:$0]  %s3, 4096, %s192, [#allocation6], 128, 128, 8
        $region24: #{ae_linear_forward.1} parent=11 // pred_fallthru
          _
        // Predicated region
        $region25: #{ae_linear_forward.1} parent=11 // pred_check
          %p198 = pneg %p128
        $region26: #{ae_linear_forward.1} parent=11 // pred_check_branch
          %200 = sbr.rel (%p198) target = $region28
        $region27: #{ae_linear_forward.1} parent=11 // pred_region
          _
        $region28: #{ae_linear_forward.1} parent=11 // pred_fallthru
          _
      $region12: #{ae_linear_forward.1} parent=5 // pred_fallthru
        _
      %p201 = scmp.lt.s32.totalorder %s18, 2
      // Predicated region
      $region29: #{ae_linear_forward.1} parent=5 // pred_check
        %p202 = pneg %p201
      $region30: #{ae_linear_forward.1} parent=5 // pred_check_branch
        %204 = sbr.rel (%p202) target = $region32
      $region31: #{ae_linear_forward.1} parent=5 // pred_region
        // Predicated region
        $region33: #{ae_linear_forward.1} parent=31 // pred_check
          %p205 = pneg %p38
        $region34: #{ae_linear_forward.1} parent=31 // pred_check_branch
          %207 = sbr.rel (%p205) target = $region36
        $region35: #{ae_linear_forward.1} parent=31 // pred_region
          %s208 = sand.u32 %s28, 1
          %s209 = scalar_lea.sflag [#allocation3], %s208
          %s210 = sand.u32 %s28, 1
          %s211 = smul.addr %s210, 1024
          %s212 = scalar_lea.vmem [#allocation2], %s211
          %s213 = smul.u32 64, %s18
          %s215 = ssub.s32 16384, 16384
          %216 = vsyncadd %s209, %s215
          %s217 = smul.addr %s213, 2
          %s218 = smul.addr %s217, 128
          %s219 = scalar_lea.hbm %s0, %s218
          %s220 = sshll.u32 %s212, 4
          %s221 = int_to_ptr.vmem [resolvable:$true] %s220
          %226 = dma.hbm_to_vmem [thread:$0]  %s219, 16384, %s221, %s209, 256, 256, 16
        $region36: #{ae_linear_forward.1} parent=31 // pred_fallthru
          _
      $region32: #{ae_linear_forward.1} parent=5 // pred_fallthru
        _
      %p227 = scmp.le.s32.totalorder 1, %s18
      %p228 = scmp.lt.s32.totalorder %s18, 3
      %p229 = pnand %p227, %p228
      %p230 = pneg %p229
      // Predicated region
      $region37: #{ae_linear_forward.1} parent=5 // pred_check
        _
      $region38: #{ae_linear_forward.1} parent=5 // pred_check_branch
        %232 = sbr.rel (%p229) target = $region40
      $region39: #{ae_linear_forward.1} parent=5 // pred_region
        %s233 = ssub.s32 %s18, 1
        %s234 = sand.u32 %s31, 1
        %s235 = scalar_lea.sflag [#allocation3], %s234
        %s236 = sand.u32 %s31, 1
        %s237 = smul.addr %s236, 1024
        %s238 = scalar_lea.vmem [#allocation2], %s237
        // Predicated region
        $region41: #{ae_linear_forward.1} parent=39 // pred_check
          %p239 = pneg %p44
        $region42: #{ae_linear_forward.1} parent=39 // pred_check_branch
          %241 = sbr.rel (%p239) target = $region44
        $region43: #{ae_linear_forward.1} parent=39 // pred_region
          %242 = dma.done %s235, 16384
        $region44: #{ae_linear_forward.1} parent=39 // pred_fallthru
          _
        // Predicated region
        $region45: #{ae_linear_forward.1} parent=39 // pred_check
          %p243 = pneg %p65
        $region46: #{ae_linear_forward.1} parent=39 // pred_check_branch
          %245 = sbr.rel (%p243) target = $region48
        $region47: #{ae_linear_forward.1} parent=39 // pred_region
          %246 = dma.done [#allocation6], 4096
        $region48: #{ae_linear_forward.1} parent=39 // pred_fallthru
          _
        // Predicated region
        $region49: #{ae_linear_forward.1} parent=39 // pred_check
          %p247 = pneg %p107
        $region50: #{ae_linear_forward.1} parent=39 // pred_check_branch
          %249 = sbr.rel (%p247) target = $region52
        $region51: #{ae_linear_forward.1} parent=39 // pred_region
          %250 = dma.done [#allocation6], 4096
        $region52: #{ae_linear_forward.1} parent=39 // pred_fallthru
          _
        %s251 = sand.u32 %s31, 1
        %s252 = scalar_lea.sflag [#allocation3], %s251
        %s253 = sand.u32 %s31, 1
        %s254 = smul.addr %s253, 1024
        %s255 = scalar_lea.vmem [#allocation2], %s254
        %p256 = pneg %p44
        %p257 = pneg %p41
        %p258 = pneg %p65
        %p259 = pneg %p62
        %p260 = pneg %p86
        %p261 = pneg %p83
        %p262 = pneg %p107
        %p263 = pneg %p104
        %p264 = pneg %p128
        %p265 = pneg %p125
        %p266 = pneg %p154
        %p267 = pneg %p151
        %s268 = sand.u32 %s141, 1
        %s269 = scalar_lea.sflag [#allocation4], %s268
        %s270 = sand.u32 %s141, 1
        %s271 = smul.addr %s270, 1024
        %s272 = scalar_lea.vmem [#allocation8], %s271
        %s273 = smul.u32 64, %s23
        %s274 = smul.u32 64, %s23
        %v275 = vld [vmem:[%s238] sm:$0xff]
        %v276 = vld [vmem:[%s238 + $0x8] sm:$0xff]
        %v277 = vld [vmem:[%s238 + $0x10] sm:$0xff]
        %v278 = vld [vmem:[%s238 + $0x18] sm:$0xff]
        %v279 = vld [vmem:[%s238 + $0x20] sm:$0xff]
        %v280 = vld [vmem:[%s238 + $0x28] sm:$0xff]
        %v281 = vld [vmem:[%s238 + $0x30] sm:$0xff]
        %v282 = vld [vmem:[%s238 + $0x38] sm:$0xff]
        %v283 = vld [vmem:[%s238 + $0x40] sm:$0xff]
        %v284 = vld [vmem:[%s238 + $0x48] sm:$0xff]
        %v285 = vld [vmem:[%s238 + $0x50] sm:$0xff]
        %v286 = vld [vmem:[%s238 + $0x58] sm:$0xff]
        %v287 = vld [vmem:[%s238 + $0x60] sm:$0xff]
        %v288 = vld [vmem:[%s238 + $0x68] sm:$0xff]
        %v289 = vld [vmem:[%s238 + $0x70] sm:$0xff]
        %v290 = vld [vmem:[%s238 + $0x78] sm:$0xff]
        %v291 = vld [vmem:[%s238 + $0x80] sm:$0xff]
        %v292 = vld [vmem:[%s238 + $0x88] sm:$0xff]
        %v293 = vld [vmem:[%s238 + $0x90] sm:$0xff]
        %v294 = vld [vmem:[%s238 + $0x98] sm:$0xff]
        %v295 = vld [vmem:[%s238 + $0xa0] sm:$0xff]
        %v296 = vld [vmem:[%s238 + $0xa8] sm:$0xff]
        %v297 = vld [vmem:[%s238 + $0xb0] sm:$0xff]
        %v298 = vld [vmem:[%s238 + $0xb8] sm:$0xff]
        %v299 = vld [vmem:[%s238 + $0xc0] sm:$0xff]
        %v300 = vld [vmem:[%s238 + $0xc8] sm:$0xff]
        %v301 = vld [vmem:[%s238 + $0xd0] sm:$0xff]
        %v302 = vld [vmem:[%s238 + $0xd8] sm:$0xff]
        %v303 = vld [vmem:[%s238 + $0xe0] sm:$0xff]
        %v304 = vld [vmem:[%s238 + $0xe8] sm:$0xff]
        %v305 = vld [vmem:[%s238 + $0xf0] sm:$0xff]
        %v306 = vld [vmem:[%s238 + $0xf8] sm:$0xff]
        %v307 = vld [vmem:[%s238 + $0x100] sm:$0xff]
        %v308 = vld [vmem:[%s238 + $0x108] sm:$0xff]
        %v309 = vld [vmem:[%s238 + $0x110] sm:$0xff]
        %v310 = vld [vmem:[%s238 + $0x118] sm:$0xff]
        %v311 = vld [vmem:[%s238 + $0x120] sm:$0xff]
        %v312 = vld [vmem:[%s238 + $0x128] sm:$0xff]
        %v313 = vld [vmem:[%s238 + $0x130] sm:$0xff]
        %v314 = vld [vmem:[%s238 + $0x138] sm:$0xff]
        %v315 = vld [vmem:[%s238 + $0x140] sm:$0xff]
        %v316 = vld [vmem:[%s238 + $0x148] sm:$0xff]
        %v317 = vld [vmem:[%s238 + $0x150] sm:$0xff]
        %v318 = vld [vmem:[%s238 + $0x158] sm:$0xff]
        %v319 = vld [vmem:[%s238 + $0x160] sm:$0xff]
        %v320 = vld [vmem:[%s238 + $0x168] sm:$0xff]
        %v321 = vld [vmem:[%s238 + $0x170] sm:$0xff]
        %v322 = vld [vmem:[%s238 + $0x178] sm:$0xff]
        %v323 = vld [vmem:[%s238 + $0x180] sm:$0xff]
        %v324 = vld [vmem:[%s238 + $0x188] sm:$0xff]
        %v325 = vld [vmem:[%s238 + $0x190] sm:$0xff]
        %v326 = vld [vmem:[%s238 + $0x198] sm:$0xff]
        %v327 = vld [vmem:[%s238 + $0x1a0] sm:$0xff]
        %v328 = vld [vmem:[%s238 + $0x1a8] sm:$0xff]
        %v329 = vld [vmem:[%s238 + $0x1b0] sm:$0xff]
        %v330 = vld [vmem:[%s238 + $0x1b8] sm:$0xff]
        %v331 = vld [vmem:[%s238 + $0x1c0] sm:$0xff]
        %v332 = vld [vmem:[%s238 + $0x1c8] sm:$0xff]
        %v333 = vld [vmem:[%s238 + $0x1d0] sm:$0xff]
        %v334 = vld [vmem:[%s238 + $0x1d8] sm:$0xff]
        %v335 = vld [vmem:[%s238 + $0x1e0] sm:$0xff]
        %v336 = vld [vmem:[%s238 + $0x1e8] sm:$0xff]
        %v337 = vld [vmem:[%s238 + $0x1f0] sm:$0xff]
        %v338 = vld [vmem:[%s238 + $0x1f8] sm:$0xff]
        %v339 = vld [vmem:[%s238 + $0x200] sm:$0xff]
        %v340 = vld [vmem:[%s238 + $0x208] sm:$0xff]
        %v341 = vld [vmem:[%s238 + $0x210] sm:$0xff]
        %v342 = vld [vmem:[%s238 + $0x218] sm:$0xff]
        %v343 = vld [vmem:[%s238 + $0x220] sm:$0xff]
        %v344 = vld [vmem:[%s238 + $0x228] sm:$0xff]
        %v345 = vld [vmem:[%s238 + $0x230] sm:$0xff]
        %v346 = vld [vmem:[%s238 + $0x238] sm:$0xff]
        %v347 = vld [vmem:[%s238 + $0x240] sm:$0xff]
        %v348 = vld [vmem:[%s238 + $0x248] sm:$0xff]
        %v349 = vld [vmem:[%s238 + $0x250] sm:$0xff]
        %v350 = vld [vmem:[%s238 + $0x258] sm:$0xff]
        %v351 = vld [vmem:[%s238 + $0x260] sm:$0xff]
        %v352 = vld [vmem:[%s238 + $0x268] sm:$0xff]
        %v353 = vld [vmem:[%s238 + $0x270] sm:$0xff]
        %v354 = vld [vmem:[%s238 + $0x278] sm:$0xff]
        %v355 = vld [vmem:[%s238 + $0x280] sm:$0xff]
        %v356 = vld [vmem:[%s238 + $0x288] sm:$0xff]
        %v357 = vld [vmem:[%s238 + $0x290] sm:$0xff]
        %v358 = vld [vmem:[%s238 + $0x298] sm:$0xff]
        %v359 = vld [vmem:[%s238 + $0x2a0] sm:$0xff]
        %v360 = vld [vmem:[%s238 + $0x2a8] sm:$0xff]
        %v361 = vld [vmem:[%s238 + $0x2b0] sm:$0xff]
        %v362 = vld [vmem:[%s238 + $0x2b8] sm:$0xff]
        %v363 = vld [vmem:[%s238 + $0x2c0] sm:$0xff]
        %v364 = vld [vmem:[%s238 + $0x2c8] sm:$0xff]
        %v365 = vld [vmem:[%s238 + $0x2d0] sm:$0xff]
        %v366 = vld [vmem:[%s238 + $0x2d8] sm:$0xff]
        %v367 = vld [vmem:[%s238 + $0x2e0] sm:$0xff]
        %v368 = vld [vmem:[%s238 + $0x2e8] sm:$0xff]
        %v369 = vld [vmem:[%s238 + $0x2f0] sm:$0xff]
        %v370 = vld [vmem:[%s238 + $0x2f8] sm:$0xff]
        %v371 = vld [vmem:[%s238 + $0x300] sm:$0xff]
        %v372 = vld [vmem:[%s238 + $0x308] sm:$0xff]
        %v373 = vld [vmem:[%s238 + $0x310] sm:$0xff]
        %v374 = vld [vmem:[%s238 + $0x318] sm:$0xff]
        %v375 = vld [vmem:[%s238 + $0x320] sm:$0xff]
        %v376 = vld [vmem:[%s238 + $0x328] sm:$0xff]
        %v377 = vld [vmem:[%s238 + $0x330] sm:$0xff]
        %v378 = vld [vmem:[%s238 + $0x338] sm:$0xff]
        %v379 = vld [vmem:[%s238 + $0x340] sm:$0xff]
        %v380 = vld [vmem:[%s238 + $0x348] sm:$0xff]
        %v381 = vld [vmem:[%s238 + $0x350] sm:$0xff]
        %v382 = vld [vmem:[%s238 + $0x358] sm:$0xff]
        %v383 = vld [vmem:[%s238 + $0x360] sm:$0xff]
        %v384 = vld [vmem:[%s238 + $0x368] sm:$0xff]
        %v385 = vld [vmem:[%s238 + $0x370] sm:$0xff]
        %v386 = vld [vmem:[%s238 + $0x378] sm:$0xff]
        %v387 = vld [vmem:[%s238 + $0x380] sm:$0xff]
        %v388 = vld [vmem:[%s238 + $0x388] sm:$0xff]
        %v389 = vld [vmem:[%s238 + $0x390] sm:$0xff]
        %v390 = vld [vmem:[%s238 + $0x398] sm:$0xff]
        %v391 = vld [vmem:[%s238 + $0x3a0] sm:$0xff]
        %v392 = vld [vmem:[%s238 + $0x3a8] sm:$0xff]
        %v393 = vld [vmem:[%s238 + $0x3b0] sm:$0xff]
        %v394 = vld [vmem:[%s238 + $0x3b8] sm:$0xff]
        %v395 = vld [vmem:[%s238 + $0x3c0] sm:$0xff]
        %v396 = vld [vmem:[%s238 + $0x3c8] sm:$0xff]
        %v397 = vld [vmem:[%s238 + $0x3d0] sm:$0xff]
        %v398 = vld [vmem:[%s238 + $0x3d8] sm:$0xff]
        %v399 = vld [vmem:[%s238 + $0x3e0] sm:$0xff]
        %v400 = vld [vmem:[%s238 + $0x3e8] sm:$0xff]
        %v401 = vld [vmem:[%s238 + $0x3f0] sm:$0xff]
        %v402 = vld [vmem:[%s238 + $0x3f8] sm:$0xff]
        %v403 = vld [vmem:[#allocation5] sm:$0xff]
        %v404 = vld [vmem:[#allocation5 + $0x8] sm:$0xff]
        %v405 = vld [vmem:[#allocation5 + $0x10] sm:$0xff]
        %v406 = vld [vmem:[#allocation5 + $0x18] sm:$0xff]
        %v407 = vld [vmem:[#allocation5 + $0x20] sm:$0xff]
        %v408 = vld [vmem:[#allocation5 + $0x28] sm:$0xff]
        %v409 = vld [vmem:[#allocation5 + $0x30] sm:$0xff]
        %v410 = vld [vmem:[#allocation5 + $0x38] sm:$0xff]
        %v411 = vld [vmem:[#allocation5 + $0x40] sm:$0xff]
        %v412 = vld [vmem:[#allocation5 + $0x48] sm:$0xff]
        %v413 = vld [vmem:[#allocation5 + $0x50] sm:$0xff]
        %v414 = vld [vmem:[#allocation5 + $0x58] sm:$0xff]
        %v415 = vld [vmem:[#allocation5 + $0x60] sm:$0xff]
        %v416 = vld [vmem:[#allocation5 + $0x68] sm:$0xff]
        %v417 = vld [vmem:[#allocation5 + $0x70] sm:$0xff]
        %v418 = vld [vmem:[#allocation5 + $0x78] sm:$0xff]
        %v419 = vld [vmem:[#allocation5 + $0x80] sm:$0xff]
        %v420 = vld [vmem:[#allocation5 + $0x88] sm:$0xff]
        %v421 = vld [vmem:[#allocation5 + $0x90] sm:$0xff]
        %v422 = vld [vmem:[#allocation5 + $0x98] sm:$0xff]
        %v423 = vld [vmem:[#allocation5 + $0xa0] sm:$0xff]
        %v424 = vld [vmem:[#allocation5 + $0xa8] sm:$0xff]
        %v425 = vld [vmem:[#allocation5 + $0xb0] sm:$0xff]
        %v426 = vld [vmem:[#allocation5 + $0xb8] sm:$0xff]
        %v427 = vld [vmem:[#allocation5 + $0xc0] sm:$0xff]
        %v428 = vld [vmem:[#allocation5 + $0xc8] sm:$0xff]
        %v429 = vld [vmem:[#allocation5 + $0xd0] sm:$0xff]
        %v430 = vld [vmem:[#allocation5 + $0xd8] sm:$0xff]
        %v431 = vld [vmem:[#allocation5 + $0xe0] sm:$0xff]
        %v432 = vld [vmem:[#allocation5 + $0xe8] sm:$0xff]
        %v433 = vld [vmem:[#allocation5 + $0xf0] sm:$0xff]
        %v434 = vld [vmem:[#allocation5 + $0xf8] sm:$0xff]
        %v435 = vld [vmem:[%s2] sm:$0x1]
        %v437 = vlaneseq
        %v438 = vshrl.u32 %v437, 7
        %v439 = vsub.s32 0, %v438
        %v440 = vrot.slane %v435, %v439
        %442 = vmatprep.subr.mxu0 %v404
        %443 = vmatpush1.xpose.msra.mxu0 %v403
        %444 = vmatprep.subr.mxu0 %v406
        %445 = vmatpush1.xpose.msra.mxu0 %v405
        %446 = vmatprep.subr.mxu0 %v408
        %447 = vmatpush1.xpose.msra.mxu0 %v407
        %448 = vmatprep.subr.mxu0 %v410
        %449 = vmatpush1.xpose.msra.mxu0 %v409
        %450 = vmatprep.subr.mxu0 %v412
        %451 = vmatpush1.xpose.msra.mxu0 %v411
        %452 = vmatprep.subr.mxu0 %v414
        %453 = vmatpush1.xpose.msra.mxu0 %v413
        %454 = vmatprep.subr.mxu0 %v416
        %455 = vmatpush1.xpose.msra.mxu0 %v415
        %456 = vmatprep.subr.mxu0 %v418
        %457 = vmatpush1.xpose.msra.mxu0 %v417
        %458 = vmatprep.subr.mxu0 %v420
        %459 = vmatpush1.xpose.msra.mxu0 %v419
        %460 = vmatprep.subr.mxu0 %v422
        %461 = vmatpush1.xpose.msra.mxu0 %v421
        %462 = vmatprep.subr.mxu0 %v424
        %463 = vmatpush1.xpose.msra.mxu0 %v423
        %464 = vmatprep.subr.mxu0 %v426
        %465 = vmatpush1.xpose.msra.mxu0 %v425
        %466 = vmatprep.subr.mxu0 %v428
        %467 = vmatpush1.xpose.msra.mxu0 %v427
        %468 = vmatprep.subr.mxu0 %v430
        %469 = vmatpush1.xpose.msra.mxu0 %v429
        %470 = vmatprep.subr.mxu0 %v432
        %471 = vmatpush1.xpose.msra.mxu0 %v431
        %472 = vmatprep.subr.mxu0 %v434
        %473 = vmatpush1.xpose.msra.mxu0 %v433
        %474 = vmatprep.subr.mxu0 0.0
        %475 = vmatpush1.xpose.msra.mxu0 0.0
        %476 = vmatprep.subr.mxu0 0.0
        %477 = vmatpush1.xpose.msra.mxu0 0.0
        %478 = vmatprep.subr.mxu0 0.0
        %479 = vmatpush1.xpose.msra.mxu0 0.0
        %480 = vmatprep.subr.mxu0 0.0
        %481 = vmatpush1.xpose.msra.mxu0 0.0
        %482 = vmatprep.subr.mxu0 0.0
        %483 = vmatpush1.xpose.msra.mxu0 0.0
        %484 = vmatprep.subr.mxu0 0.0
        %485 = vmatpush1.xpose.msra.mxu0 0.0
        %486 = vmatprep.subr.mxu0 0.0
        %487 = vmatpush1.xpose.msra.mxu0 0.0
        %488 = vmatprep.subr.mxu0 0.0
        %489 = vmatpush1.xpose.msra.mxu0 0.0
        %490 = vmatprep.subr.mxu0 0.0
        %491 = vmatpush1.xpose.msra.mxu0 0.0
        %492 = vmatprep.subr.mxu0 0.0
        %493 = vmatpush1.xpose.msra.mxu0 0.0
        %494 = vmatprep.subr.mxu0 0.0
        %495 = vmatpush1.xpose.msra.mxu0 0.0
        %496 = vmatprep.subr.mxu0 0.0
        %497 = vmatpush1.xpose.msra.mxu0 0.0
        %498 = vmatprep.subr.mxu0 0.0
        %499 = vmatpush1.xpose.msra.mxu0 0.0
        %500 = vmatprep.subr.mxu0 0.0
        %501 = vmatpush1.xpose.msra.mxu0 0.0
        %502 = vmatprep.subr.mxu0 0.0
        %503 = vmatpush1.xpose.msra.mxu0 0.0
        %504 = vmatprep.subr.mxu0 0.0
        %505 = vmatpush1.xpose.msra.mxu0 0.0
        %506 = vmatprep.mubr.f32.mxu0 %v276
        %507 = vmatmul.mubr.f32.gmra.mrb[0].mxu0 %v275
        %v508 = vpop.f32.mrb[0].mxu0
        %v509 = vadd.f32 %v440, %v508
        %v510 = vpop.f32.mrb[0].mxu0
        %511 = vmatprep.mubr.f32.mxu0 %v278
        %512 = vmatmul.mubr.f32.gmra.mrb[0].mxu0 %v277
        %v513 = vpop.f32.mrb[0].mxu0
        %v514 = vadd.f32 %v440, %v513
        %v515 = vpop.f32.mrb[0].mxu0
        %516 = vmatprep.mubr.f32.mxu0 %v280
        %517 = vmatmul.mubr.f32.gmra.mrb[0].mxu0 %v279
        %v518 = vpop.f32.mrb[0].mxu0
        %v519 = vadd.f32 %v440, %v518
        %v520 = vpop.f32.mrb[0].mxu0
        %521 = vmatprep.mubr.f32.mxu0 %v282
        %522 = vmatmul.mubr.f32.gmra.mrb[0].mxu0 %v281
        %v523 = vpop.f32.mrb[0].mxu0
        %v524 = vadd.f32 %v440, %v523
        %v525 = vpop.f32.mrb[0].mxu0
        %526 = vmatprep.mubr.f32.mxu0 %v284
        %527 = vmatmul.mubr.f32.gmra.mrb[0].mxu0 %v283
        %v528 = vpop.f32.mrb[0].mxu0
        %v529 = vadd.f32 %v440, %v528
        %v530 = vpop.f32.mrb[0].mxu0
        %531 = vmatprep.mubr.f32.mxu0 %v286
        %532 = vmatmul.mubr.f32.gmra.mrb[0].mxu0 %v285
        %v533 = vpop.f32.mrb[0].mxu0
        %v534 = vadd.f32 %v440, %v533
        %v535 = vpop.f32.mrb[0].mxu0
        %536 = vmatprep.mubr.f32.mxu0 %v288
        %537 = vmatmul.mubr.f32.gmra.mrb[0].mxu0 %v287
        %v538 = vpop.f32.mrb[0].mxu0
        %v539 = vadd.f32 %v440, %v538
        %v540 = vpop.f32.mrb[0].mxu0
        %541 = vmatprep.mubr.f32.mxu0 %v290
        %542 = vmatmul.mubr.f32.gmra.mrb[0].mxu0 %v289
        %v543 = vpop.f32.mrb[0].mxu0
        %v544 = vadd.f32 %v440, %v543
        %v545 = vpop.f32.mrb[0].mxu0
        %546 = vmatprep.mubr.f32.mxu0 %v292
        %547 = vmatmul.mubr.f32.gmra.mrb[0].mxu0 %v291
        %v548 = vpop.f32.mrb[0].mxu0
        %v549 = vadd.f32 %v440, %v548
        %v550 = vpop.f32.mrb[0].mxu0
        %551 = vmatprep.mubr.f32.mxu0 %v294
        %552 = vmatmul.mubr.f32.gmra.mrb[0].mxu0 %v293
        %v553 = vpop.f32.mrb[0].mxu0
        %v554 = vadd.f32 %v440, %v553
        %v555 = vpop.f32.mrb[0].mxu0
        %556 = vmatprep.mubr.f32.mxu0 %v296
        %557 = vmatmul.mubr.f32.gmra.mrb[0].mxu0 %v295
        %v558 = vpop.f32.mrb[0].mxu0
        %v559 = vadd.f32 %v440, %v558
        %v560 = vpop.f32.mrb[0].mxu0
        %561 = vmatprep.mubr.f32.mxu0 %v298
        %562 = vmatmul.mubr.f32.gmra.mrb[0].mxu0 %v297
        %v563 = vpop.f32.mrb[0].mxu0
        %v564 = vadd.f32 %v440, %v563
        %v565 = vpop.f32.mrb[0].mxu0
        %566 = vmatprep.mubr.f32.mxu0 %v300
        %567 = vmatmul.mubr.f32.gmra.mrb[0].mxu0 %v299
        %v568 = vpop.f32.mrb[0].mxu0
        %v569 = vadd.f32 %v440, %v568
        %v570 = vpop.f32.mrb[0].mxu0
        %571 = vmatprep.mubr.f32.mxu0 %v302
        %572 = vmatmul.mubr.f32.gmra.mrb[0].mxu0 %v301
        %v573 = vpop.f32.mrb[0].mxu0
        %v574 = vadd.f32 %v440, %v573
        %v575 = vpop.f32.mrb[0].mxu0
        %576 = vmatprep.mubr.f32.mxu0 %v304
        %577 = vmatmul.mubr.f32.gmra.mrb[0].mxu0 %v303
        %v578 = vpop.f32.mrb[0].mxu0
        %v579 = vadd.f32 %v440, %v578
        %v580 = vpop.f32.mrb[0].mxu0
        %581 = vmatprep.mubr.f32.mxu0 %v306
        %582 = vmatmul.mubr.f32.gmra.mrb[0].mxu0 %v305
        %v583 = vpop.f32.mrb[0].mxu0
        %v584 = vadd.f32 %v440, %v583
        %v585 = vpop.f32.mrb[0].mxu0
        %586 = vmatprep.mubr.f32.mxu0 %v308
        %587 = vmatmul.mubr.f32.gmra.mrb[0].mxu0 %v307
        %v588 = vpop.f32.mrb[0].mxu0
        %v589 = vadd.f32 %v440, %v588
        %v590 = vpop.f32.mrb[0].mxu0
        %591 = vmatprep.mubr.f32.mxu0 %v310
        %592 = vmatmul.mubr.f32.gmra.mrb[0].mxu0 %v309
        %v593 = vpop.f32.mrb[0].mxu0
        %v594 = vadd.f32 %v440, %v593
        %v595 = vpop.f32.mrb[0].mxu0
        %596 = vmatprep.mubr.f32.mxu0 %v312
        %597 = vmatmul.mubr.f32.gmra.mrb[0].mxu0 %v311
        %v598 = vpop.f32.mrb[0].mxu0
        %v599 = vadd.f32 %v440, %v598
        %v600 = vpop.f32.mrb[0].mxu0
        %601 = vmatprep.mubr.f32.mxu0 %v314
        %602 = vmatmul.mubr.f32.gmra.mrb[0].mxu0 %v313
        %v603 = vpop.f32.mrb[0].mxu0
        %v604 = vadd.f32 %v440, %v603
        %v605 = vpop.f32.mrb[0].mxu0
        %606 = vmatprep.mubr.f32.mxu0 %v316
        %607 = vmatmul.mubr.f32.gmra.mrb[0].mxu0 %v315
        %v608 = vpop.f32.mrb[0].mxu0
        %v609 = vadd.f32 %v440, %v608
        %v610 = vpop.f32.mrb[0].mxu0
        %611 = vmatprep.mubr.f32.mxu0 %v318
        %612 = vmatmul.mubr.f32.gmra.mrb[0].mxu0 %v317
        %v613 = vpop.f32.mrb[0].mxu0
        %v614 = vadd.f32 %v440, %v613
        %v615 = vpop.f32.mrb[0].mxu0
        %616 = vmatprep.mubr.f32.mxu0 %v320
        %617 = vmatmul.mubr.f32.gmra.mrb[0].mxu0 %v319
        %v618 = vpop.f32.mrb[0].mxu0
        %v619 = vadd.f32 %v440, %v618
        %v620 = vpop.f32.mrb[0].mxu0
        %621 = vmatprep.mubr.f32.mxu0 %v322
        %622 = vmatmul.mubr.f32.gmra.mrb[0].mxu0 %v321
        %v623 = vpop.f32.mrb[0].mxu0
        %v624 = vadd.f32 %v440, %v623
        %v625 = vpop.f32.mrb[0].mxu0
        %626 = vmatprep.mubr.f32.mxu0 %v324
        %627 = vmatmul.mubr.f32.gmra.mrb[0].mxu0 %v323
        %v628 = vpop.f32.mrb[0].mxu0
        %v629 = vadd.f32 %v440, %v628
        %v630 = vpop.f32.mrb[0].mxu0
        %631 = vmatprep.mubr.f32.mxu0 %v326
        %632 = vmatmul.mubr.f32.gmra.mrb[0].mxu0 %v325
        %v633 = vpop.f32.mrb[0].mxu0
        %v634 = vadd.f32 %v440, %v633
        %v635 = vpop.f32.mrb[0].mxu0
        %636 = vmatprep.mubr.f32.mxu0 %v328
        %637 = vmatmul.mubr.f32.gmra.mrb[0].mxu0 %v327
        %v638 = vpop.f32.mrb[0].mxu0
        %v639 = vadd.f32 %v440, %v638
        %v640 = vpop.f32.mrb[0].mxu0
        %641 = vmatprep.mubr.f32.mxu0 %v330
        %642 = vmatmul.mubr.f32.gmra.mrb[0].mxu0 %v329
        %v643 = vpop.f32.mrb[0].mxu0
        %v644 = vadd.f32 %v440, %v643
        %v645 = vpop.f32.mrb[0].mxu0
        %646 = vmatprep.mubr.f32.mxu0 %v332
        %647 = vmatmul.mubr.f32.gmra.mrb[0].mxu0 %v331
        %v648 = vpop.f32.mrb[0].mxu0
        %v649 = vadd.f32 %v440, %v648
        %v650 = vpop.f32.mrb[0].mxu0
        %651 = vmatprep.mubr.f32.mxu0 %v334
        %652 = vmatmul.mubr.f32.gmra.mrb[0].mxu0 %v333
        %v653 = vpop.f32.mrb[0].mxu0
        %v654 = vadd.f32 %v440, %v653
        %v655 = vpop.f32.mrb[0].mxu0
        %656 = vmatprep.mubr.f32.mxu0 %v336
        %657 = vmatmul.mubr.f32.gmra.mrb[0].mxu0 %v335
        %v658 = vpop.f32.mrb[0].mxu0
        %v659 = vadd.f32 %v440, %v658
        %v660 = vpop.f32.mrb[0].mxu0
        %661 = vmatprep.mubr.f32.mxu0 %v338
        %662 = vmatmul.mubr.f32.gmra.mrb[0].mxu0 %v337
        %v663 = vpop.f32.mrb[0].mxu0
        %v664 = vadd.f32 %v440, %v663
        %v665 = vpop.f32.mrb[0].mxu0
        %666 = vmatprep.mubr.f32.mxu0 %v340
        %667 = vmatmul.mubr.f32.gmra.mrb[0].mxu0 %v339
        %v668 = vpop.f32.mrb[0].mxu0
        %v669 = vadd.f32 %v440, %v668
        %v670 = vpop.f32.mrb[0].mxu0
        %671 = vmatprep.mubr.f32.mxu0 %v342
        %672 = vmatmul.mubr.f32.gmra.mrb[0].mxu0 %v341
        %v673 = vpop.f32.mrb[0].mxu0
        %v674 = vadd.f32 %v440, %v673
        %v675 = vpop.f32.mrb[0].mxu0
        %676 = vmatprep.mubr.f32.mxu0 %v344
        %677 = vmatmul.mubr.f32.gmra.mrb[0].mxu0 %v343
        %v678 = vpop.f32.mrb[0].mxu0
        %v679 = vadd.f32 %v440, %v678
        %v680 = vpop.f32.mrb[0].mxu0
        %681 = vmatprep.mubr.f32.mxu0 %v346
        %682 = vmatmul.mubr.f32.gmra.mrb[0].mxu0 %v345
        %v683 = vpop.f32.mrb[0].mxu0
        %v684 = vadd.f32 %v440, %v683
        %v685 = vpop.f32.mrb[0].mxu0
        %686 = vmatprep.mubr.f32.mxu0 %v348
        %687 = vmatmul.mubr.f32.gmra.mrb[0].mxu0 %v347
        %v688 = vpop.f32.mrb[0].mxu0
        %v689 = vadd.f32 %v440, %v688
        %v690 = vpop.f32.mrb[0].mxu0
        %691 = vmatprep.mubr.f32.mxu0 %v350
        %692 = vmatmul.mubr.f32.gmra.mrb[0].mxu0 %v349
        %v693 = vpop.f32.mrb[0].mxu0
        %v694 = vadd.f32 %v440, %v693
        %v695 = vpop.f32.mrb[0].mxu0
        %696 = vmatprep.mubr.f32.mxu0 %v352
        %697 = vmatmul.mubr.f32.gmra.mrb[0].mxu0 %v351
        %v698 = vpop.f32.mrb[0].mxu0
        %v699 = vadd.f32 %v440, %v698
        %v700 = vpop.f32.mrb[0].mxu0
        %701 = vmatprep.mubr.f32.mxu0 %v354
        %702 = vmatmul.mubr.f32.gmra.mrb[0].mxu0 %v353
        %v703 = vpop.f32.mrb[0].mxu0
        %v704 = vadd.f32 %v440, %v703
        %v705 = vpop.f32.mrb[0].mxu0
        %706 = vmatprep.mubr.f32.mxu0 %v356
        %707 = vmatmul.mubr.f32.gmra.mrb[0].mxu0 %v355
        %v708 = vpop.f32.mrb[0].mxu0
        %v709 = vadd.f32 %v440, %v708
        %v710 = vpop.f32.mrb[0].mxu0
        %711 = vmatprep.mubr.f32.mxu0 %v358
        %712 = vmatmul.mubr.f32.gmra.mrb[0].mxu0 %v357
        %v713 = vpop.f32.mrb[0].mxu0
        %v714 = vadd.f32 %v440, %v713
        %v715 = vpop.f32.mrb[0].mxu0
        %716 = vmatprep.mubr.f32.mxu0 %v360
        %717 = vmatmul.mubr.f32.gmra.mrb[0].mxu0 %v359
        %v718 = vpop.f32.mrb[0].mxu0
        %v719 = vadd.f32 %v440, %v718
        %v720 = vpop.f32.mrb[0].mxu0
        %721 = vmatprep.mubr.f32.mxu0 %v362
        %722 = vmatmul.mubr.f32.gmra.mrb[0].mxu0 %v361
        %v723 = vpop.f32.mrb[0].mxu0
        %v724 = vadd.f32 %v440, %v723
        %v725 = vpop.f32.mrb[0].mxu0
        %726 = vmatprep.mubr.f32.mxu0 %v364
        %727 = vmatmul.mubr.f32.gmra.mrb[0].mxu0 %v363
        %v728 = vpop.f32.mrb[0].mxu0
        %v729 = vadd.f32 %v440, %v728
        %v730 = vpop.f32.mrb[0].mxu0
        %731 = vmatprep.mubr.f32.mxu0 %v366
        %732 = vmatmul.mubr.f32.gmra.mrb[0].mxu0 %v365
        %v733 = vpop.f32.mrb[0].mxu0
        %v734 = vadd.f32 %v440, %v733
        %v735 = vpop.f32.mrb[0].mxu0
        %736 = vmatprep.mubr.f32.mxu0 %v368
        %737 = vmatmul.mubr.f32.gmra.mrb[0].mxu0 %v367
        %v738 = vpop.f32.mrb[0].mxu0
        %v739 = vadd.f32 %v440, %v738
        %v740 = vpop.f32.mrb[0].mxu0
        %741 = vmatprep.mubr.f32.mxu0 %v370
        %742 = vmatmul.mubr.f32.gmra.mrb[0].mxu0 %v369
        %v743 = vpop.f32.mrb[0].mxu0
        %v744 = vadd.f32 %v440, %v743
        %v745 = vpop.f32.mrb[0].mxu0
        %746 = vmatprep.mubr.f32.mxu0 %v372
        %747 = vmatmul.mubr.f32.gmra.mrb[0].mxu0 %v371
        %v748 = vpop.f32.mrb[0].mxu0
        %v749 = vadd.f32 %v440, %v748
        %v750 = vpop.f32.mrb[0].mxu0
        %751 = vmatprep.mubr.f32.mxu0 %v374
        %752 = vmatmul.mubr.f32.gmra.mrb[0].mxu0 %v373
        %v753 = vpop.f32.mrb[0].mxu0
        %v754 = vadd.f32 %v440, %v753
        %v755 = vpop.f32.mrb[0].mxu0
        %756 = vmatprep.mubr.f32.mxu0 %v376
        %757 = vmatmul.mubr.f32.gmra.mrb[0].mxu0 %v375
        %v758 = vpop.f32.mrb[0].mxu0
        %v759 = vadd.f32 %v440, %v758
        %v760 = vpop.f32.mrb[0].mxu0
        %761 = vmatprep.mubr.f32.mxu0 %v378
        %762 = vmatmul.mubr.f32.gmra.mrb[0].mxu0 %v377
        %v763 = vpop.f32.mrb[0].mxu0
        %v764 = vadd.f32 %v440, %v763
        %v765 = vpop.f32.mrb[0].mxu0
        %766 = vmatprep.mubr.f32.mxu0 %v380
        %767 = vmatmul.mubr.f32.gmra.mrb[0].mxu0 %v379
        %v768 = vpop.f32.mrb[0].mxu0
        %v769 = vadd.f32 %v440, %v768
        %v770 = vpop.f32.mrb[0].mxu0
        %771 = vmatprep.mubr.f32.mxu0 %v382
        %772 = vmatmul.mubr.f32.gmra.mrb[0].mxu0 %v381
        %v773 = vpop.f32.mrb[0].mxu0
        %v774 = vadd.f32 %v440, %v773
        %v775 = vpop.f32.mrb[0].mxu0
        %776 = vmatprep.mubr.f32.mxu0 %v384
        %777 = vmatmul.mubr.f32.gmra.mrb[0].mxu0 %v383
        %v778 = vpop.f32.mrb[0].mxu0
        %v779 = vadd.f32 %v440, %v778
        %v780 = vpop.f32.mrb[0].mxu0
        %781 = vmatprep.mubr.f32.mxu0 %v386
        %782 = vmatmul.mubr.f32.gmra.mrb[0].mxu0 %v385
        %v783 = vpop.f32.mrb[0].mxu0
        %v784 = vadd.f32 %v440, %v783
        %v785 = vpop.f32.mrb[0].mxu0
        %786 = vmatprep.mubr.f32.mxu0 %v388
        %787 = vmatmul.mubr.f32.gmra.mrb[0].mxu0 %v387
        %v788 = vpop.f32.mrb[0].mxu0
        %v789 = vadd.f32 %v440, %v788
        %v790 = vpop.f32.mrb[0].mxu0
        %791 = vmatprep.mubr.f32.mxu0 %v390
        %792 = vmatmul.mubr.f32.gmra.mrb[0].mxu0 %v389
        %v793 = vpop.f32.mrb[0].mxu0
        %v794 = vadd.f32 %v440, %v793
        %v795 = vpop.f32.mrb[0].mxu0
        %796 = vmatprep.mubr.f32.mxu0 %v392
        %797 = vmatmul.mubr.f32.gmra.mrb[0].mxu0 %v391
        %v798 = vpop.f32.mrb[0].mxu0
        %v799 = vadd.f32 %v440, %v798
        %v800 = vpop.f32.mrb[0].mxu0
        %801 = vmatprep.mubr.f32.mxu0 %v394
        %802 = vmatmul.mubr.f32.gmra.mrb[0].mxu0 %v393
        %v803 = vpop.f32.mrb[0].mxu0
        %v804 = vadd.f32 %v440, %v803
        %v805 = vpop.f32.mrb[0].mxu0
        %806 = vmatprep.mubr.f32.mxu0 %v396
        %807 = vmatmul.mubr.f32.gmra.mrb[0].mxu0 %v395
        %v808 = vpop.f32.mrb[0].mxu0
        %v809 = vadd.f32 %v440, %v808
        %v810 = vpop.f32.mrb[0].mxu0
        %811 = vmatprep.mubr.f32.mxu0 %v398
        %812 = vmatmul.mubr.f32.gmra.mrb[0].mxu0 %v397
        %v813 = vpop.f32.mrb[0].mxu0
        %v814 = vadd.f32 %v440, %v813
        %v815 = vpop.f32.mrb[0].mxu0
        %816 = vmatprep.mubr.f32.mxu0 %v400
        %817 = vmatmul.mubr.f32.gmra.mrb[0].mxu0 %v399
        %v818 = vpop.f32.mrb[0].mxu0
        %v819 = vadd.f32 %v440, %v818
        %v820 = vpop.f32.mrb[0].mxu0
        %821 = vmatprep.mubr.f32.mxu0 %v402
        %822 = vmatmul.mubr.f32.gmra.mrb[0].mxu0 %v401
        %v823 = vpop.f32.mrb[0].mxu0
        %v824 = vadd.f32 %v440, %v823
        %v825 = vpop.f32.mrb[0].mxu0
        %826 = vdwg.mxu0
        %v827 = vld [vmem:[#allocation7] sm:$0xff]
        %v828 = vld [vmem:[#allocation7 + $0x8] sm:$0xff]
        %v829 = vld [vmem:[#allocation7 + $0x10] sm:$0xff]
        %v830 = vld [vmem:[#allocation7 + $0x18] sm:$0xff]
        %v831 = vld [vmem:[#allocation7 + $0x20] sm:$0xff]
        %v832 = vld [vmem:[#allocation7 + $0x28] sm:$0xff]
        %v833 = vld [vmem:[#allocation7 + $0x30] sm:$0xff]
        %v834 = vld [vmem:[#allocation7 + $0x38] sm:$0xff]
        %v835 = vld [vmem:[#allocation7 + $0x40] sm:$0xff]
        %v836 = vld [vmem:[#allocation7 + $0x48] sm:$0xff]
        %v837 = vld [vmem:[#allocation7 + $0x50] sm:$0xff]
        %v838 = vld [vmem:[#allocation7 + $0x58] sm:$0xff]
        %v839 = vld [vmem:[#allocation7 + $0x60] sm:$0xff]
        %v840 = vld [vmem:[#allocation7 + $0x68] sm:$0xff]
        %v841 = vld [vmem:[#allocation7 + $0x70] sm:$0xff]
        %v842 = vld [vmem:[#allocation7 + $0x78] sm:$0xff]
        %v843 = vld [vmem:[#allocation7 + $0x80] sm:$0xff]
        %v844 = vld [vmem:[#allocation7 + $0x88] sm:$0xff]
        %v845 = vld [vmem:[#allocation7 + $0x90] sm:$0xff]
        %v846 = vld [vmem:[#allocation7 + $0x98] sm:$0xff]
        %v847 = vld [vmem:[#allocation7 + $0xa0] sm:$0xff]
        %v848 = vld [vmem:[#allocation7 + $0xa8] sm:$0xff]
        %v849 = vld [vmem:[#allocation7 + $0xb0] sm:$0xff]
        %v850 = vld [vmem:[#allocation7 + $0xb8] sm:$0xff]
        %v851 = vld [vmem:[#allocation7 + $0xc0] sm:$0xff]
        %v852 = vld [vmem:[#allocation7 + $0xc8] sm:$0xff]
        %v853 = vld [vmem:[#allocation7 + $0xd0] sm:$0xff]
        %v854 = vld [vmem:[#allocation7 + $0xd8] sm:$0xff]
        %v855 = vld [vmem:[#allocation7 + $0xe0] sm:$0xff]
        %v856 = vld [vmem:[#allocation7 + $0xe8] sm:$0xff]
        %v857 = vld [vmem:[#allocation7 + $0xf0] sm:$0xff]
        %v858 = vld [vmem:[#allocation7 + $0xf8] sm:$0xff]
        %v859 = vld [vmem:[%s4] sm:$0x3]
        %v861 = vlaneseq
        %v862 = vshrl.u32 %v861, 7
        %v863 = vsub.s32 0, %v862
        %v864 = vrot.slane %v859, %v863
        %v865 = vlaneseq
        %v866 = vshrl.u32 %v865, 7
        %v867 = vsub.s32 1, %v866
        %v868 = vrot.slane %v859, %v867
        %871 = vmatprep.subr.mxu0 0.0
        %872 = vmatpush1.xpose.msra.mxu0 %v827
        %873 = vmatprep.subr.mxu0 0.0
        %874 = vmatpush1.xpose.msra.mxu0 %v828
        %875 = vmatprep.subr.mxu0 0.0
        %876 = vmatpush1.xpose.msra.mxu0 %v829
        %877 = vmatprep.subr.mxu0 0.0
        %878 = vmatpush1.xpose.msra.mxu0 %v830
        %879 = vmatprep.subr.mxu0 0.0
        %880 = vmatpush1.xpose.msra.mxu0 %v831
        %881 = vmatprep.subr.mxu0 0.0
        %882 = vmatpush1.xpose.msra.mxu0 %v832
        %883 = vmatprep.subr.mxu0 0.0
        %884 = vmatpush1.xpose.msra.mxu0 %v833
        %885 = vmatprep.subr.mxu0 0.0
        %886 = vmatpush1.xpose.msra.mxu0 %v834
        %887 = vmatprep.subr.mxu0 0.0
        %888 = vmatpush1.xpose.msra.mxu0 %v835
        %889 = vmatprep.subr.mxu0 0.0
        %890 = vmatpush1.xpose.msra.mxu0 %v836
        %891 = vmatprep.subr.mxu0 0.0
        %892 = vmatpush1.xpose.msra.mxu0 %v837
        %893 = vmatprep.subr.mxu0 0.0
        %894 = vmatpush1.xpose.msra.mxu0 %v838
        %895 = vmatprep.subr.mxu0 0.0
        %896 = vmatpush1.xpose.msra.mxu0 %v839
        %897 = vmatprep.subr.mxu0 0.0
        %898 = vmatpush1.xpose.msra.mxu0 %v840
        %899 = vmatprep.subr.mxu0 0.0
        %900 = vmatpush1.xpose.msra.mxu0 %v841
        %901 = vmatprep.subr.mxu0 0.0
        %902 = vmatpush1.xpose.msra.mxu0 %v842
        %903 = vmatprep.subr.mxu0 0.0
        %904 = vmatpush1.xpose.msra.mxu0 %v843
        %905 = vmatprep.subr.mxu0 0.0
        %906 = vmatpush1.xpose.msra.mxu0 %v844
        %907 = vmatprep.subr.mxu0 0.0
        %908 = vmatpush1.xpose.msra.mxu0 %v845
        %909 = vmatprep.subr.mxu0 0.0
        %910 = vmatpush1.xpose.msra.mxu0 %v846
        %911 = vmatprep.subr.mxu0 0.0
        %912 = vmatpush1.xpose.msra.mxu0 %v847
        %913 = vmatprep.subr.mxu0 0.0
        %914 = vmatpush1.xpose.msra.mxu0 %v848
        %915 = vmatprep.subr.mxu0 0.0
        %916 = vmatpush1.xpose.msra.mxu0 %v849
        %917 = vmatprep.subr.mxu0 0.0
        %918 = vmatpush1.xpose.msra.mxu0 %v850
        %919 = vmatprep.subr.mxu0 0.0
        %920 = vmatpush1.xpose.msra.mxu0 %v851
        %921 = vmatprep.subr.mxu0 0.0
        %922 = vmatpush1.xpose.msra.mxu0 %v852
        %923 = vmatprep.subr.mxu0 0.0
        %924 = vmatpush1.xpose.msra.mxu0 %v853
        %925 = vmatprep.subr.mxu0 0.0
        %926 = vmatpush1.xpose.msra.mxu0 %v854
        %927 = vmatprep.subr.mxu0 0.0
        %928 = vmatpush1.xpose.msra.mxu0 %v855
        %929 = vmatprep.subr.mxu0 0.0
        %930 = vmatpush1.xpose.msra.mxu0 %v856
        %931 = vmatprep.subr.mxu0 0.0
        %932 = vmatpush1.xpose.msra.mxu0 %v857
        %933 = vmatprep.subr.mxu0 0.0
        %934 = vmatpush1.xpose.msra.mxu0 %v858
        %935 = vmatprep.mubr.f32.mxu0 0.0
        %936 = vmatmul.mubr.f32.gmra.mrb[0].mxu0 %v509
        %v937 = vpop.f32.mrb[0].mxu0
        %v938 = vadd.f32 %v864, %v937
        %v939 = vpop.f32.mrb[0].mxu0
        %v940 = vadd.f32 %v868, %v939
        %941 = vmatprep.mubr.f32.mxu0 0.0
        %942 = vmatmul.mubr.f32.gmra.mrb[0].mxu0 %v514
        %v943 = vpop.f32.mrb[0].mxu0
        %v944 = vadd.f32 %v864, %v943
        %v945 = vpop.f32.mrb[0].mxu0
        %v946 = vadd.f32 %v868, %v945
        %947 = vmatprep.mubr.f32.mxu0 0.0
        %948 = vmatmul.mubr.f32.gmra.mrb[0].mxu0 %v519
        %v949 = vpop.f32.mrb[0].mxu0
        %v950 = vadd.f32 %v864, %v949
        %v951 = vpop.f32.mrb[0].mxu0
        %v952 = vadd.f32 %v868, %v951
        %953 = vmatprep.mubr.f32.mxu0 0.0
        %954 = vmatmul.mubr.f32.gmra.mrb[0].mxu0 %v524
        %v955 = vpop.f32.mrb[0].mxu0
        %v956 = vadd.f32 %v864, %v955
        %v957 = vpop.f32.mrb[0].mxu0
        %v958 = vadd.f32 %v868, %v957
        %959 = vmatprep.mubr.f32.mxu0 0.0
        %960 = vmatmul.mubr.f32.gmra.mrb[0].mxu0 %v529
        %v961 = vpop.f32.mrb[0].mxu0
        %v962 = vadd.f32 %v864, %v961
        %v963 = vpop.f32.mrb[0].mxu0
        %v964 = vadd.f32 %v868, %v963
        %965 = vmatprep.mubr.f32.mxu0 0.0
        %966 = vmatmul.mubr.f32.gmra.mrb[0].mxu0 %v534
        %v967 = vpop.f32.mrb[0].mxu0
        %v968 = vadd.f32 %v864, %v967
        %v969 = vpop.f32.mrb[0].mxu0
        %v970 = vadd.f32 %v868, %v969
        %971 = vmatprep.mubr.f32.mxu0 0.0
        %972 = vmatmul.mubr.f32.gmra.mrb[0].mxu0 %v539
        %v973 = vpop.f32.mrb[0].mxu0
        %v974 = vadd.f32 %v864, %v973
        %v975 = vpop.f32.mrb[0].mxu0
        %v976 = vadd.f32 %v868, %v975
        %977 = vmatprep.mubr.f32.mxu0 0.0
        %978 = vmatmul.mubr.f32.gmra.mrb[0].mxu0 %v544
        %v979 = vpop.f32.mrb[0].mxu0
        %v980 = vadd.f32 %v864, %v979
        %v981 = vpop.f32.mrb[0].mxu0
        %v982 = vadd.f32 %v868, %v981
        %983 = vmatprep.mubr.f32.mxu0 0.0
        %984 = vmatmul.mubr.f32.gmra.mrb[0].mxu0 %v549
        %v985 = vpop.f32.mrb[0].mxu0
        %v986 = vadd.f32 %v864, %v985
        %v987 = vpop.f32.mrb[0].mxu0
        %v988 = vadd.f32 %v868, %v987
        %989 = vmatprep.mubr.f32.mxu0 0.0
        %990 = vmatmul.mubr.f32.gmra.mrb[0].mxu0 %v554
        %v991 = vpop.f32.mrb[0].mxu0
        %v992 = vadd.f32 %v864, %v991
        %v993 = vpop.f32.mrb[0].mxu0
        %v994 = vadd.f32 %v868, %v993
        %995 = vmatprep.mubr.f32.mxu0 0.0
        %996 = vmatmul.mubr.f32.gmra.mrb[0].mxu0 %v559
        %v997 = vpop.f32.mrb[0].mxu0
        %v998 = vadd.f32 %v864, %v997
        %v999 = vpop.f32.mrb[0].mxu0
        %v1000 = vadd.f32 %v868, %v999
        %1001 = vmatprep.mubr.f32.mxu0 0.0
        %1002 = vmatmul.mubr.f32.gmra.mrb[0].mxu0 %v564
        %v1003 = vpop.f32.mrb[0].mxu0
        %v1004 = vadd.f32 %v864, %v1003
        %v1005 = vpop.f32.mrb[0].mxu0
        %v1006 = vadd.f32 %v868, %v1005
        %1007 = vmatprep.mubr.f32.mxu0 0.0
        %1008 = vmatmul.mubr.f32.gmra.mrb[0].mxu0 %v569
        %v1009 = vpop.f32.mrb[0].mxu0
        %v1010 = vadd.f32 %v864, %v1009
        %v1011 = vpop.f32.mrb[0].mxu0
        %v1012 = vadd.f32 %v868, %v1011
        %1013 = vmatprep.mubr.f32.mxu0 0.0
        %1014 = vmatmul.mubr.f32.gmra.mrb[0].mxu0 %v574
        %v1015 = vpop.f32.mrb[0].mxu0
        %v1016 = vadd.f32 %v864, %v1015
        %v1017 = vpop.f32.mrb[0].mxu0
        %v1018 = vadd.f32 %v868, %v1017
        %1019 = vmatprep.mubr.f32.mxu0 0.0
        %1020 = vmatmul.mubr.f32.gmra.mrb[0].mxu0 %v579
        %v1021 = vpop.f32.mrb[0].mxu0
        %v1022 = vadd.f32 %v864, %v1021
        %v1023 = vpop.f32.mrb[0].mxu0
        %v1024 = vadd.f32 %v868, %v1023
        %1025 = vmatprep.mubr.f32.mxu0 0.0
        %1026 = vmatmul.mubr.f32.gmra.mrb[0].mxu0 %v584
        %v1027 = vpop.f32.mrb[0].mxu0
        %v1028 = vadd.f32 %v864, %v1027
        %v1029 = vpop.f32.mrb[0].mxu0
        %v1030 = vadd.f32 %v868, %v1029
        %1031 = vmatprep.mubr.f32.mxu0 0.0
        %1032 = vmatmul.mubr.f32.gmra.mrb[0].mxu0 %v589
        %v1033 = vpop.f32.mrb[0].mxu0
        %v1034 = vadd.f32 %v864, %v1033
        %v1035 = vpop.f32.mrb[0].mxu0
        %v1036 = vadd.f32 %v868, %v1035
        %1037 = vmatprep.mubr.f32.mxu0 0.0
        %1038 = vmatmul.mubr.f32.gmra.mrb[0].mxu0 %v594
        %v1039 = vpop.f32.mrb[0].mxu0
        %v1040 = vadd.f32 %v864, %v1039
        %v1041 = vpop.f32.mrb[0].mxu0
        %v1042 = vadd.f32 %v868, %v1041
        %1043 = vmatprep.mubr.f32.mxu0 0.0
        %1044 = vmatmul.mubr.f32.gmra.mrb[0].mxu0 %v599
        %v1045 = vpop.f32.mrb[0].mxu0
        %v1046 = vadd.f32 %v864, %v1045
        %v1047 = vpop.f32.mrb[0].mxu0
        %v1048 = vadd.f32 %v868, %v1047
        %1049 = vmatprep.mubr.f32.mxu0 0.0
        %1050 = vmatmul.mubr.f32.gmra.mrb[0].mxu0 %v604
        %v1051 = vpop.f32.mrb[0].mxu0
        %v1052 = vadd.f32 %v864, %v1051
        %v1053 = vpop.f32.mrb[0].mxu0
        %v1054 = vadd.f32 %v868, %v1053
        %1055 = vmatprep.mubr.f32.mxu0 0.0
        %1056 = vmatmul.mubr.f32.gmra.mrb[0].mxu0 %v609
        %v1057 = vpop.f32.mrb[0].mxu0
        %v1058 = vadd.f32 %v864, %v1057
        %v1059 = vpop.f32.mrb[0].mxu0
        %v1060 = vadd.f32 %v868, %v1059
        %1061 = vmatprep.mubr.f32.mxu0 0.0
        %1062 = vmatmul.mubr.f32.gmra.mrb[0].mxu0 %v614
        %v1063 = vpop.f32.mrb[0].mxu0
        %v1064 = vadd.f32 %v864, %v1063
        %v1065 = vpop.f32.mrb[0].mxu0
        %v1066 = vadd.f32 %v868, %v1065
        %1067 = vmatprep.mubr.f32.mxu0 0.0
        %1068 = vmatmul.mubr.f32.gmra.mrb[0].mxu0 %v619
        %v1069 = vpop.f32.mrb[0].mxu0
        %v1070 = vadd.f32 %v864, %v1069
        %v1071 = vpop.f32.mrb[0].mxu0
        %v1072 = vadd.f32 %v868, %v1071
        %1073 = vmatprep.mubr.f32.mxu0 0.0
        %1074 = vmatmul.mubr.f32.gmra.mrb[0].mxu0 %v624
        %v1075 = vpop.f32.mrb[0].mxu0
        %v1076 = vadd.f32 %v864, %v1075
        %v1077 = vpop.f32.mrb[0].mxu0
        %v1078 = vadd.f32 %v868, %v1077
        %1079 = vmatprep.mubr.f32.mxu0 0.0
        %1080 = vmatmul.mubr.f32.gmra.mrb[0].mxu0 %v629
        %v1081 = vpop.f32.mrb[0].mxu0
        %v1082 = vadd.f32 %v864, %v1081
        %v1083 = vpop.f32.mrb[0].mxu0
        %v1084 = vadd.f32 %v868, %v1083
        %1085 = vmatprep.mubr.f32.mxu0 0.0
        %1086 = vmatmul.mubr.f32.gmra.mrb[0].mxu0 %v634
        %v1087 = vpop.f32.mrb[0].mxu0
        %v1088 = vadd.f32 %v864, %v1087
        %v1089 = vpop.f32.mrb[0].mxu0
        %v1090 = vadd.f32 %v868, %v1089
        %1091 = vmatprep.mubr.f32.mxu0 0.0
        %1092 = vmatmul.mubr.f32.gmra.mrb[0].mxu0 %v639
        %v1093 = vpop.f32.mrb[0].mxu0
        %v1094 = vadd.f32 %v864, %v1093
        %v1095 = vpop.f32.mrb[0].mxu0
        %v1096 = vadd.f32 %v868, %v1095
        %1097 = vmatprep.mubr.f32.mxu0 0.0
        %1098 = vmatmul.mubr.f32.gmra.mrb[0].mxu0 %v644
        %v1099 = vpop.f32.mrb[0].mxu0
        %v1100 = vadd.f32 %v864, %v1099
        %v1101 = vpop.f32.mrb[0].mxu0
        %v1102 = vadd.f32 %v868, %v1101
        %1103 = vmatprep.mubr.f32.mxu0 0.0
        %1104 = vmatmul.mubr.f32.gmra.mrb[0].mxu0 %v649
        %v1105 = vpop.f32.mrb[0].mxu0
        %v1106 = vadd.f32 %v864, %v1105
        %v1107 = vpop.f32.mrb[0].mxu0
        %v1108 = vadd.f32 %v868, %v1107
        %1109 = vmatprep.mubr.f32.mxu0 0.0
        %1110 = vmatmul.mubr.f32.gmra.mrb[0].mxu0 %v654
        %v1111 = vpop.f32.mrb[0].mxu0
        %v1112 = vadd.f32 %v864, %v1111
        %v1113 = vpop.f32.mrb[0].mxu0
        %v1114 = vadd.f32 %v868, %v1113
        %1115 = vmatprep.mubr.f32.mxu0 0.0
        %1116 = vmatmul.mubr.f32.gmra.mrb[0].mxu0 %v659
        %v1117 = vpop.f32.mrb[0].mxu0
        %v1118 = vadd.f32 %v864, %v1117
        %v1119 = vpop.f32.mrb[0].mxu0
        %v1120 = vadd.f32 %v868, %v1119
        %1121 = vmatprep.mubr.f32.mxu0 0.0
        %1122 = vmatmul.mubr.f32.gmra.mrb[0].mxu0 %v664
        %v1123 = vpop.f32.mrb[0].mxu0
        %v1124 = vadd.f32 %v864, %v1123
        %v1125 = vpop.f32.mrb[0].mxu0
        %v1126 = vadd.f32 %v868, %v1125
        %1127 = vmatprep.mubr.f32.mxu0 0.0
        %1128 = vmatmul.mubr.f32.gmra.mrb[0].mxu0 %v669
        %v1129 = vpop.f32.mrb[0].mxu0
        %v1130 = vadd.f32 %v864, %v1129
        %v1131 = vpop.f32.mrb[0].mxu0
        %v1132 = vadd.f32 %v868, %v1131
        %1133 = vmatprep.mubr.f32.mxu0 0.0
        %1134 = vmatmul.mubr.f32.gmra.mrb[0].mxu0 %v674
        %v1135 = vpop.f32.mrb[0].mxu0
        %v1136 = vadd.f32 %v864, %v1135
        %v1137 = vpop.f32.mrb[0].mxu0
        %v1138 = vadd.f32 %v868, %v1137
        %1139 = vmatprep.mubr.f32.mxu0 0.0
        %1140 = vmatmul.mubr.f32.gmra.mrb[0].mxu0 %v679
        %v1141 = vpop.f32.mrb[0].mxu0
        %v1142 = vadd.f32 %v864, %v1141
        %v1143 = vpop.f32.mrb[0].mxu0
        %v1144 = vadd.f32 %v868, %v1143
        %1145 = vmatprep.mubr.f32.mxu0 0.0
        %1146 = vmatmul.mubr.f32.gmra.mrb[0].mxu0 %v684
        %v1147 = vpop.f32.mrb[0].mxu0
        %v1148 = vadd.f32 %v864, %v1147
        %v1149 = vpop.f32.mrb[0].mxu0
        %v1150 = vadd.f32 %v868, %v1149
        %1151 = vmatprep.mubr.f32.mxu0 0.0
        %1152 = vmatmul.mubr.f32.gmra.mrb[0].mxu0 %v689
        %v1153 = vpop.f32.mrb[0].mxu0
        %v1154 = vadd.f32 %v864, %v1153
        %v1155 = vpop.f32.mrb[0].mxu0
        %v1156 = vadd.f32 %v868, %v1155
        %1157 = vmatprep.mubr.f32.mxu0 0.0
        %1158 = vmatmul.mubr.f32.gmra.mrb[0].mxu0 %v694
        %v1159 = vpop.f32.mrb[0].mxu0
        %v1160 = vadd.f32 %v864, %v1159
        %v1161 = vpop.f32.mrb[0].mxu0
        %v1162 = vadd.f32 %v868, %v1161
        %1163 = vmatprep.mubr.f32.mxu0 0.0
        %1164 = vmatmul.mubr.f32.gmra.mrb[0].mxu0 %v699
        %v1165 = vpop.f32.mrb[0].mxu0
        %v1166 = vadd.f32 %v864, %v1165
        %v1167 = vpop.f32.mrb[0].mxu0
        %v1168 = vadd.f32 %v868, %v1167
        %1169 = vmatprep.mubr.f32.mxu0 0.0
        %1170 = vmatmul.mubr.f32.gmra.mrb[0].mxu0 %v704
        %v1171 = vpop.f32.mrb[0].mxu0
        %v1172 = vadd.f32 %v864, %v1171
        %v1173 = vpop.f32.mrb[0].mxu0
        %v1174 = vadd.f32 %v868, %v1173
        %1175 = vmatprep.mubr.f32.mxu0 0.0
        %1176 = vmatmul.mubr.f32.gmra.mrb[0].mxu0 %v709
        %v1177 = vpop.f32.mrb[0].mxu0
        %v1178 = vadd.f32 %v864, %v1177
        %v1179 = vpop.f32.mrb[0].mxu0
        %v1180 = vadd.f32 %v868, %v1179
        %1181 = vmatprep.mubr.f32.mxu0 0.0
        %1182 = vmatmul.mubr.f32.gmra.mrb[0].mxu0 %v714
        %v1183 = vpop.f32.mrb[0].mxu0
        %v1184 = vadd.f32 %v864, %v1183
        %v1185 = vpop.f32.mrb[0].mxu0
        %v1186 = vadd.f32 %v868, %v1185
        %1187 = vmatprep.mubr.f32.mxu0 0.0
        %1188 = vmatmul.mubr.f32.gmra.mrb[0].mxu0 %v719
        %v1189 = vpop.f32.mrb[0].mxu0
        %v1190 = vadd.f32 %v864, %v1189
        %v1191 = vpop.f32.mrb[0].mxu0
        %v1192 = vadd.f32 %v868, %v1191
        %1193 = vmatprep.mubr.f32.mxu0 0.0
        %1194 = vmatmul.mubr.f32.gmra.mrb[0].mxu0 %v724
        %v1195 = vpop.f32.mrb[0].mxu0
        %v1196 = vadd.f32 %v864, %v1195
        %v1197 = vpop.f32.mrb[0].mxu0
        %v1198 = vadd.f32 %v868, %v1197
        %1199 = vmatprep.mubr.f32.mxu0 0.0
        %1200 = vmatmul.mubr.f32.gmra.mrb[0].mxu0 %v729
        %v1201 = vpop.f32.mrb[0].mxu0
        %v1202 = vadd.f32 %v864, %v1201
        %v1203 = vpop.f32.mrb[0].mxu0
        %v1204 = vadd.f32 %v868, %v1203
        %1205 = vmatprep.mubr.f32.mxu0 0.0
        %1206 = vmatmul.mubr.f32.gmra.mrb[0].mxu0 %v734
        %v1207 = vpop.f32.mrb[0].mxu0
        %v1208 = vadd.f32 %v864, %v1207
        %v1209 = vpop.f32.mrb[0].mxu0
        %v1210 = vadd.f32 %v868, %v1209
        %1211 = vmatprep.mubr.f32.mxu0 0.0
        %1212 = vmatmul.mubr.f32.gmra.mrb[0].mxu0 %v739
        %v1213 = vpop.f32.mrb[0].mxu0
        %v1214 = vadd.f32 %v864, %v1213
        %v1215 = vpop.f32.mrb[0].mxu0
        %v1216 = vadd.f32 %v868, %v1215
        %1217 = vmatprep.mubr.f32.mxu0 0.0
        %1218 = vmatmul.mubr.f32.gmra.mrb[0].mxu0 %v744
        %v1219 = vpop.f32.mrb[0].mxu0
        %v1220 = vadd.f32 %v864, %v1219
        %v1221 = vpop.f32.mrb[0].mxu0
        %v1222 = vadd.f32 %v868, %v1221
        %1223 = vmatprep.mubr.f32.mxu0 0.0
        %1224 = vmatmul.mubr.f32.gmra.mrb[0].mxu0 %v749
        %v1225 = vpop.f32.mrb[0].mxu0
        %v1226 = vadd.f32 %v864, %v1225
        %v1227 = vpop.f32.mrb[0].mxu0
        %v1228 = vadd.f32 %v868, %v1227
        %1229 = vmatprep.mubr.f32.mxu0 0.0
        %1230 = vmatmul.mubr.f32.gmra.mrb[0].mxu0 %v754
        %v1231 = vpop.f32.mrb[0].mxu0
        %v1232 = vadd.f32 %v864, %v1231
        %v1233 = vpop.f32.mrb[0].mxu0
        %v1234 = vadd.f32 %v868, %v1233
        %1235 = vmatprep.mubr.f32.mxu0 0.0
        %1236 = vmatmul.mubr.f32.gmra.mrb[0].mxu0 %v759
        %v1237 = vpop.f32.mrb[0].mxu0
        %v1238 = vadd.f32 %v864, %v1237
        %v1239 = vpop.f32.mrb[0].mxu0
        %v1240 = vadd.f32 %v868, %v1239
        %1241 = vmatprep.mubr.f32.mxu0 0.0
        %1242 = vmatmul.mubr.f32.gmra.mrb[0].mxu0 %v764
        %v1243 = vpop.f32.mrb[0].mxu0
        %v1244 = vadd.f32 %v864, %v1243
        %v1245 = vpop.f32.mrb[0].mxu0
        %v1246 = vadd.f32 %v868, %v1245
        %1247 = vmatprep.mubr.f32.mxu0 0.0
        %1248 = vmatmul.mubr.f32.gmra.mrb[0].mxu0 %v769
        %v1249 = vpop.f32.mrb[0].mxu0
        %v1250 = vadd.f32 %v864, %v1249
        %v1251 = vpop.f32.mrb[0].mxu0
        %v1252 = vadd.f32 %v868, %v1251
        %1253 = vmatprep.mubr.f32.mxu0 0.0
        %1254 = vmatmul.mubr.f32.gmra.mrb[0].mxu0 %v774
        %v1255 = vpop.f32.mrb[0].mxu0
        %v1256 = vadd.f32 %v864, %v1255
        %v1257 = vpop.f32.mrb[0].mxu0
        %v1258 = vadd.f32 %v868, %v1257
        %1259 = vmatprep.mubr.f32.mxu0 0.0
        %1260 = vmatmul.mubr.f32.gmra.mrb[0].mxu0 %v779
        %v1261 = vpop.f32.mrb[0].mxu0
        %v1262 = vadd.f32 %v864, %v1261
        %v1263 = vpop.f32.mrb[0].mxu0
        %v1264 = vadd.f32 %v868, %v1263
        %1265 = vmatprep.mubr.f32.mxu0 0.0
        %1266 = vmatmul.mubr.f32.gmra.mrb[0].mxu0 %v784
        %v1267 = vpop.f32.mrb[0].mxu0
        %v1268 = vadd.f32 %v864, %v1267
        %v1269 = vpop.f32.mrb[0].mxu0
        %v1270 = vadd.f32 %v868, %v1269
        %1271 = vmatprep.mubr.f32.mxu0 0.0
        %1272 = vmatmul.mubr.f32.gmra.mrb[0].mxu0 %v789
        %v1273 = vpop.f32.mrb[0].mxu0
        %v1274 = vadd.f32 %v864, %v1273
        %v1275 = vpop.f32.mrb[0].mxu0
        %v1276 = vadd.f32 %v868, %v1275
        %1277 = vmatprep.mubr.f32.mxu0 0.0
        %1278 = vmatmul.mubr.f32.gmra.mrb[0].mxu0 %v794
        %v1279 = vpop.f32.mrb[0].mxu0
        %v1280 = vadd.f32 %v864, %v1279
        %v1281 = vpop.f32.mrb[0].mxu0
        %v1282 = vadd.f32 %v868, %v1281
        %1283 = vmatprep.mubr.f32.mxu0 0.0
        %1284 = vmatmul.mubr.f32.gmra.mrb[0].mxu0 %v799
        %v1285 = vpop.f32.mrb[0].mxu0
        %v1286 = vadd.f32 %v864, %v1285
        %v1287 = vpop.f32.mrb[0].mxu0
        %v1288 = vadd.f32 %v868, %v1287
        %1289 = vmatprep.mubr.f32.mxu0 0.0
        %1290 = vmatmul.mubr.f32.gmra.mrb[0].mxu0 %v804
        %v1291 = vpop.f32.mrb[0].mxu0
        %v1292 = vadd.f32 %v864, %v1291
        %v1293 = vpop.f32.mrb[0].mxu0
        %v1294 = vadd.f32 %v868, %v1293
        %1295 = vmatprep.mubr.f32.mxu0 0.0
        %1296 = vmatmul.mubr.f32.gmra.mrb[0].mxu0 %v809
        %v1297 = vpop.f32.mrb[0].mxu0
        %v1298 = vadd.f32 %v864, %v1297
        %v1299 = vpop.f32.mrb[0].mxu0
        %v1300 = vadd.f32 %v868, %v1299
        %1301 = vmatprep.mubr.f32.mxu0 0.0
        %1302 = vmatmul.mubr.f32.gmra.mrb[0].mxu0 %v814
        %v1303 = vpop.f32.mrb[0].mxu0
        %v1304 = vadd.f32 %v864, %v1303
        %v1305 = vpop.f32.mrb[0].mxu0
        %v1306 = vadd.f32 %v868, %v1305
        %1307 = vmatprep.mubr.f32.mxu0 0.0
        %1308 = vmatmul.mubr.f32.gmra.mrb[0].mxu0 %v819
        %v1309 = vpop.f32.mrb[0].mxu0
        %v1310 = vadd.f32 %v864, %v1309
        %v1311 = vpop.f32.mrb[0].mxu0
        %v1312 = vadd.f32 %v868, %v1311
        %1313 = vmatprep.mubr.f32.mxu0 0.0
        %1314 = vmatmul.mubr.f32.gmra.mrb[0].mxu0 %v824
        %v1315 = vpop.f32.mrb[0].mxu0
        %v1316 = vadd.f32 %v864, %v1315
        %v1317 = vpop.f32.mrb[0].mxu0
        %v1318 = vadd.f32 %v868, %v1317
        %1319 = vdwg.mxu0
        %1320 = vst [vmem:[%s272] sm:$0xff] %v938
        %1321 = vst [vmem:[%s272 + $0x8] sm:$0xff] %v940
        %1322 = vst [vmem:[%s272 + $0x10] sm:$0xff] %v944
        %1323 = vst [vmem:[%s272 + $0x18] sm:$0xff] %v946
        %1324 = vst [vmem:[%s272 + $0x20] sm:$0xff] %v950
        %1325 = vst [vmem:[%s272 + $0x28] sm:$0xff] %v952
        %1326 = vst [vmem:[%s272 + $0x30] sm:$0xff] %v956
        %1327 = vst [vmem:[%s272 + $0x38] sm:$0xff] %v958
        %1328 = vst [vmem:[%s272 + $0x40] sm:$0xff] %v962
        %1329 = vst [vmem:[%s272 + $0x48] sm:$0xff] %v964
        %1330 = vst [vmem:[%s272 + $0x50] sm:$0xff] %v968
        %1331 = vst [vmem:[%s272 + $0x58] sm:$0xff] %v970
        %1332 = vst [vmem:[%s272 + $0x60] sm:$0xff] %v974
        %1333 = vst [vmem:[%s272 + $0x68] sm:$0xff] %v976
        %1334 = vst [vmem:[%s272 + $0x70] sm:$0xff] %v980
        %1335 = vst [vmem:[%s272 + $0x78] sm:$0xff] %v982
        %1336 = vst [vmem:[%s272 + $0x80] sm:$0xff] %v986
        %1337 = vst [vmem:[%s272 + $0x88] sm:$0xff] %v988
        %1338 = vst [vmem:[%s272 + $0x90] sm:$0xff] %v992
        %1339 = vst [vmem:[%s272 + $0x98] sm:$0xff] %v994
        %1340 = vst [vmem:[%s272 + $0xa0] sm:$0xff] %v998
        %1341 = vst [vmem:[%s272 + $0xa8] sm:$0xff] %v1000
        %1342 = vst [vmem:[%s272 + $0xb0] sm:$0xff] %v1004
        %1343 = vst [vmem:[%s272 + $0xb8] sm:$0xff] %v1006
        %1344 = vst [vmem:[%s272 + $0xc0] sm:$0xff] %v1010
        %1345 = vst [vmem:[%s272 + $0xc8] sm:$0xff] %v1012
        %1346 = vst [vmem:[%s272 + $0xd0] sm:$0xff] %v1016
        %1347 = vst [vmem:[%s272 + $0xd8] sm:$0xff] %v1018
        %1348 = vst [vmem:[%s272 + $0xe0] sm:$0xff] %v1022
        %1349 = vst [vmem:[%s272 + $0xe8] sm:$0xff] %v1024
        %1350 = vst [vmem:[%s272 + $0xf0] sm:$0xff] %v1028
        %1351 = vst [vmem:[%s272 + $0xf8] sm:$0xff] %v1030
        %1352 = vst [vmem:[%s272 + $0x100] sm:$0xff] %v1034
        %1353 = vst [vmem:[%s272 + $0x108] sm:$0xff] %v1036
        %1354 = vst [vmem:[%s272 + $0x110] sm:$0xff] %v1040
        %1355 = vst [vmem:[%s272 + $0x118] sm:$0xff] %v1042
        %1356 = vst [vmem:[%s272 + $0x120] sm:$0xff] %v1046
        %1357 = vst [vmem:[%s272 + $0x128] sm:$0xff] %v1048
        %1358 = vst [vmem:[%s272 + $0x130] sm:$0xff] %v1052
        %1359 = vst [vmem:[%s272 + $0x138] sm:$0xff] %v1054
        %1360 = vst [vmem:[%s272 + $0x140] sm:$0xff] %v1058
        %1361 = vst [vmem:[%s272 + $0x148] sm:$0xff] %v1060
        %1362 = vst [vmem:[%s272 + $0x150] sm:$0xff] %v1064
        %1363 = vst [vmem:[%s272 + $0x158] sm:$0xff] %v1066
        %1364 = vst [vmem:[%s272 + $0x160] sm:$0xff] %v1070
        %1365 = vst [vmem:[%s272 + $0x168] sm:$0xff] %v1072
        %1366 = vst [vmem:[%s272 + $0x170] sm:$0xff] %v1076
        %1367 = vst [vmem:[%s272 + $0x178] sm:$0xff] %v1078
        %1368 = vst [vmem:[%s272 + $0x180] sm:$0xff] %v1082
        %1369 = vst [vmem:[%s272 + $0x188] sm:$0xff] %v1084
        %1370 = vst [vmem:[%s272 + $0x190] sm:$0xff] %v1088
        %1371 = vst [vmem:[%s272 + $0x198] sm:$0xff] %v1090
        %1372 = vst [vmem:[%s272 + $0x1a0] sm:$0xff] %v1094
        %1373 = vst [vmem:[%s272 + $0x1a8] sm:$0xff] %v1096
        %1374 = vst [vmem:[%s272 + $0x1b0] sm:$0xff] %v1100
        %1375 = vst [vmem:[%s272 + $0x1b8] sm:$0xff] %v1102
        %1376 = vst [vmem:[%s272 + $0x1c0] sm:$0xff] %v1106
        %1377 = vst [vmem:[%s272 + $0x1c8] sm:$0xff] %v1108
        %1378 = vst [vmem:[%s272 + $0x1d0] sm:$0xff] %v1112
        %1379 = vst [vmem:[%s272 + $0x1d8] sm:$0xff] %v1114
        %1380 = vst [vmem:[%s272 + $0x1e0] sm:$0xff] %v1118
        %1381 = vst [vmem:[%s272 + $0x1e8] sm:$0xff] %v1120
        %1382 = vst [vmem:[%s272 + $0x1f0] sm:$0xff] %v1124
        %1383 = vst [vmem:[%s272 + $0x1f8] sm:$0xff] %v1126
        %1384 = vst [vmem:[%s272 + $0x200] sm:$0xff] %v1130
        %1385 = vst [vmem:[%s272 + $0x208] sm:$0xff] %v1132
        %1386 = vst [vmem:[%s272 + $0x210] sm:$0xff] %v1136
        %1387 = vst [vmem:[%s272 + $0x218] sm:$0xff] %v1138
        %1388 = vst [vmem:[%s272 + $0x220] sm:$0xff] %v1142
        %1389 = vst [vmem:[%s272 + $0x228] sm:$0xff] %v1144
        %1390 = vst [vmem:[%s272 + $0x230] sm:$0xff] %v1148
        %1391 = vst [vmem:[%s272 + $0x238] sm:$0xff] %v1150
        %1392 = vst [vmem:[%s272 + $0x240] sm:$0xff] %v1154
        %1393 = vst [vmem:[%s272 + $0x248] sm:$0xff] %v1156
        %1394 = vst [vmem:[%s272 + $0x250] sm:$0xff] %v1160
        %1395 = vst [vmem:[%s272 + $0x258] sm:$0xff] %v1162
        %1396 = vst [vmem:[%s272 + $0x260] sm:$0xff] %v1166
        %1397 = vst [vmem:[%s272 + $0x268] sm:$0xff] %v1168
        %1398 = vst [vmem:[%s272 + $0x270] sm:$0xff] %v1172
        %1399 = vst [vmem:[%s272 + $0x278] sm:$0xff] %v1174
        %1400 = vst [vmem:[%s272 + $0x280] sm:$0xff] %v1178
        %1401 = vst [vmem:[%s272 + $0x288] sm:$0xff] %v1180
        %1402 = vst [vmem:[%s272 + $0x290] sm:$0xff] %v1184
        %1403 = vst [vmem:[%s272 + $0x298] sm:$0xff] %v1186
        %1404 = vst [vmem:[%s272 + $0x2a0] sm:$0xff] %v1190
        %1405 = vst [vmem:[%s272 + $0x2a8] sm:$0xff] %v1192
        %1406 = vst [vmem:[%s272 + $0x2b0] sm:$0xff] %v1196
        %1407 = vst [vmem:[%s272 + $0x2b8] sm:$0xff] %v1198
        %1408 = vst [vmem:[%s272 + $0x2c0] sm:$0xff] %v1202
        %1409 = vst [vmem:[%s272 + $0x2c8] sm:$0xff] %v1204
        %1410 = vst [vmem:[%s272 + $0x2d0] sm:$0xff] %v1208
        %1411 = vst [vmem:[%s272 + $0x2d8] sm:$0xff] %v1210
        %1412 = vst [vmem:[%s272 + $0x2e0] sm:$0xff] %v1214
        %1413 = vst [vmem:[%s272 + $0x2e8] sm:$0xff] %v1216
        %1414 = vst [vmem:[%s272 + $0x2f0] sm:$0xff] %v1220
        %1415 = vst [vmem:[%s272 + $0x2f8] sm:$0xff] %v1222
        %1416 = vst [vmem:[%s272 + $0x300] sm:$0xff] %v1226
        %1417 = vst [vmem:[%s272 + $0x308] sm:$0xff] %v1228
        %1418 = vst [vmem:[%s272 + $0x310] sm:$0xff] %v1232
        %1419 = vst [vmem:[%s272 + $0x318] sm:$0xff] %v1234
        %1420 = vst [vmem:[%s272 + $0x320] sm:$0xff] %v1238
        %1421 = vst [vmem:[%s272 + $0x328] sm:$0xff] %v1240
        %1422 = vst [vmem:[%s272 + $0x330] sm:$0xff] %v1244
        %1423 = vst [vmem:[%s272 + $0x338] sm:$0xff] %v1246
        %1424 = vst [vmem:[%s272 + $0x340] sm:$0xff] %v1250
        %1425 = vst [vmem:[%s272 + $0x348] sm:$0xff] %v1252
        %1426 = vst [vmem:[%s272 + $0x350] sm:$0xff] %v1256
        %1427 = vst [vmem:[%s272 + $0x358] sm:$0xff] %v1258
        %1428 = vst [vmem:[%s272 + $0x360] sm:$0xff] %v1262
        %1429 = vst [vmem:[%s272 + $0x368] sm:$0xff] %v1264
        %1430 = vst [vmem:[%s272 + $0x370] sm:$0xff] %v1268
        %1431 = vst [vmem:[%s272 + $0x378] sm:$0xff] %v1270
        %1432 = vst [vmem:[%s272 + $0x380] sm:$0xff] %v1274
        %1433 = vst [vmem:[%s272 + $0x388] sm:$0xff] %v1276
        %1434 = vst [vmem:[%s272 + $0x390] sm:$0xff] %v1280
        %1435 = vst [vmem:[%s272 + $0x398] sm:$0xff] %v1282
        %1436 = vst [vmem:[%s272 + $0x3a0] sm:$0xff] %v1286
        %1437 = vst [vmem:[%s272 + $0x3a8] sm:$0xff] %v1288
        %1438 = vst [vmem:[%s272 + $0x3b0] sm:$0xff] %v1292
        %1439 = vst [vmem:[%s272 + $0x3b8] sm:$0xff] %v1294
        %1440 = vst [vmem:[%s272 + $0x3c0] sm:$0xff] %v1298
        %1441 = vst [vmem:[%s272 + $0x3c8] sm:$0xff] %v1300
        %1442 = vst [vmem:[%s272 + $0x3d0] sm:$0xff] %v1304
        %1443 = vst [vmem:[%s272 + $0x3d8] sm:$0xff] %v1306
        %1444 = vst [vmem:[%s272 + $0x3e0] sm:$0xff] %v1310
        %1445 = vst [vmem:[%s272 + $0x3e8] sm:$0xff] %v1312
        %1446 = vst [vmem:[%s272 + $0x3f0] sm:$0xff] %v1316
        %1447 = vst [vmem:[%s272 + $0x3f8] sm:$0xff] %v1318
        %s1448 = sand.u32 %s141, 1
        %s1449 = scalar_lea.sflag [#allocation4], %s1448
        %s1450 = sand.u32 %s141, 1
        %s1451 = smul.addr %s1450, 1024
        %s1452 = scalar_lea.vmem [#allocation8], %s1451
        // Predicated region
        $region53: #{ae_linear_forward.1} parent=39 // pred_check
          %p1453 = pneg %p151
        $region54: #{ae_linear_forward.1} parent=39 // pred_check_branch
          %1455 = sbr.rel (%p1453) target = $region56
        $region55: #{ae_linear_forward.1} parent=39 // pred_region
          %s1456 = smul.u32 64, %s23
          %s1458 = ssub.s32 16384, 16384
          %1459 = vsyncadd %s1449, %s1458
          %s1460 = smul.addr %s1456, 2
          %s1461 = smul.addr %s1460, 128
          %s1462 = scalar_lea.hbm %s5, %s1461
          %s1463 = sshll.u32 %s1452, 4
          %s1464 = int_to_ptr.vmem [resolvable:$true] %s1463
          %1469 = dma.vmem_to_hbm [thread:$0]  %s1464, 16384, %s1462, %s1449, 256, 256, 16
        $region56: #{ae_linear_forward.1} parent=39 // pred_fallthru
          _
      $region40: #{ae_linear_forward.1} parent=5 // pred_fallthru
        _
      %p1470 = scmp.le.s32.totalorder 2, %s18
      // Predicated region
      $region57: #{ae_linear_forward.1} parent=5 // pred_check
        %p1471 = pneg %p1470
      $region58: #{ae_linear_forward.1} parent=5 // pred_check_branch
        %1473 = sbr.rel (%p1471) target = $region60
      $region59: #{ae_linear_forward.1} parent=5 // pred_region
        %s1474 = ssub.s32 %s18, 2
        // Predicated region
        $region61: #{ae_linear_forward.1} parent=59 // pred_check
          %p1475 = pneg %p157
        $region62: #{ae_linear_forward.1} parent=59 // pred_check_branch
          %1477 = sbr.rel (%p1475) target = $region64
        $region63: #{ae_linear_forward.1} parent=59 // pred_region
          %s1478 = sand.u32 %s142, 1
          %s1479 = scalar_lea.sflag [#allocation4], %s1478
          %s1480 = sand.u32 %s142, 1
          %s1481 = smul.addr %s1480, 1024
          %s1482 = scalar_lea.vmem [#allocation8], %s1481
          %1483 = dma.done %s1479, 16384
        $region64: #{ae_linear_forward.1} parent=59 // pred_fallthru
          _
      $region60: #{ae_linear_forward.1} parent=5 // pred_fallthru
        _
    $region6: #{ae_linear_forward.1} parent=1 // loop_footer
      %s22 = sadd.s32 1, %s18
    $region7: #{ae_linear_forward.1} parent=1 // loop_footer_branch
      %17 = sbr.rel target = $region3
    $region8: #{ae_linear_forward.1} parent=1 // loop_exit
      _
    %1484 = vsyncpa [#allocation3], 1
    %s1485 = scalar_lea.sflag [#allocation3], 1
    %1486 = vsyncpa %s1485, 1
    %1487 = vsyncpa [#allocation6], 1
    %1488 = vsyncpa [#allocation4], 1
    %s1489 = scalar_lea.sflag [#allocation4], 1
    %1490 = vsyncpa %s1489, 1

</llo_original>
